<compile_context>
chip_gen: v7x
topology: tpu7x:2x2x1
jax: 0.10.0
libtpu: 0.0.40
codegen_flags: <defaults>
</compile_context>

<pallas_src>
import functools

import numpy as np
import jax
import jax.numpy as jnp
from jax import lax
from jax.experimental import pallas as pl
from jax.experimental.pallas import tpu as pltpu


def _mfvi_kernel(edge_ref, sib_ref, cop_ref, grd_ref, mask_ref,
                 lq0_ref, lq1_ref, q0_ref, q1_ref, *, max_iter: int):
    tb = edge_ref.shape[0]
    S = edge_ref.shape[-1]

    # Batch-independent 2-D factor: off_diag[i, j] = (i != j).
    r = lax.broadcasted_iota(jnp.int32, (S, S), 0)
    c = lax.broadcasted_iota(jnp.int32, (S, S), 1)
    off_diag = (r != c).astype(jnp.float32)            # [S, S]

    for b in range(tb):                                # static unroll over block
        edge = edge_ref[b].astype(jnp.float32)         # [S, S]  (h, m)
        mask = mask_ref[b]                             # [S, S]  (h, m) f32 0/1
        sib = sib_ref[b]                               # [S, S, S] (h, m, s) native dtype
        cop = cop_ref[b]
        grd = grd_ref[b]

        # Second-order mask m2[h,m,s] = mask[h,m]*mask[s,m]*(s!=m)*(s!=h)
        # is never materialized; instead:
        #   a_ms[m,s] = mask[s,m]*(s!=m)   (fused into per-iteration weights)
        #   off_diag[h,s] = (s!=h)
        #   mask[h,m]                      (applied after the reduction)
        a_ms = mask.T * off_diag                       # [S, S]  (m, s)

        # MFVI iterations: x is the channel-1 logit (channel 0 stays 0), so the
        # 2-way softmax is sigmoid(x).
        x = jnp.zeros((S, S), jnp.float32)             # x[h, m]
        for _ in range(max_iter):
            q = 1.0 / (1.0 + jnp.exp(-x))              # Q[h, m]
            qt = q.T                                   # Q^T (reused twice)
            q_sib = qt * a_ms                          # [m,s]: Q[s,m]*mask[s,m]*(s!=m)
            q_cop = q * off_diag                       # [h,s]: Q[h,s]*(s!=h)
            q_grd = qt * off_diag                      # [h,s]: Q[s,h]*(s!=h)

            # t_sib[h,m] = sum_s sib*Q[s,m]*m2 / mask[h,m]
            t_sib = jnp.sum(sib * q_sib[None, :, :] * off_diag[:, None, :],
                            axis=-1)
            # cop and grd share the remaining a_ms factor -> single reduction.
            t_cg = jnp.sum((cop * q_cop[:, None, :] + grd * q_grd[:, None, :])
                           * a_ms[None, :, :], axis=-1)
            x = edge + mask * (t_sib + t_cg)

        # log_softmax over the two channels [0, x] (stable softplus form).
        lse = jnp.maximum(x, 0.0) + jnp.log(1.0 + jnp.exp(-jnp.abs(x)))
        lq0 = -lse
        lq1 = x - lse
        lq0_ref[b] = lq0
        lq1_ref[b] = lq1
        q0_ref[b] = jnp.exp(lq0)                       # marginals, EUP slot
        q1_ref[b] = jnp.exp(lq1)


def mfvi_semantic_dependency(s_edge, s_sib, s_cop, s_grd, mask,
                             target=None, max_iter=3):
    """Forward pass of MFVISemanticDependency. Returns marginals [B,S,S,2],
    or (loss, marginals) if target is given."""
    B, S, _ = s_edge.shape
    mask_f = mask.astype(jnp.float32)

    item3 = jnp.dtype(s_sib.dtype).itemsize
    item_e = jnp.dtype(s_edge.dtype).itemsize
    s3_bytes = S * S * S * item3

    # Batch-block size: amortize per-step overhead for small S while keeping
    # the per-step S^3 footprint modest; must divide B (tb=1 for large S).
    budget = 4 * 2 ** 20
    tb = max(1, min(B, 8, budget // max(1, 3 * s3_bytes)))
    while B % tb:
        tb -= 1
    grid = (B // tb,)

    spec3 = pl.BlockSpec((tb, S, S), lambda n: (n, 0, 0))
    spec4 = pl.BlockSpec((tb, S, S, S), lambda n: (n, 0, 0, 0))

    # Scoped-VMEM budget: double-buffered in/out blocks + f32 working temps.
    in_bytes = tb * (3 * s3_bytes + S * S * item_e + S * S * 4)
    out_bytes = tb * 4 * S * S * 4
    work_bytes = tb * (3 * S * S * S * 4 + 16 * S * S * 4)
    vmem_limit = int(min(64 * 2 ** 20,
                         max(8 * 2 ** 20,
                             2 * (in_bytes + out_bytes) + work_bytes)))

    cost = pl.CostEstimate(
        flops=int(B * (max_iter * 10 * S ** 3 + 8 * S * S)),
        transcendentals=int(B * (max_iter + 3) * S * S),
        bytes_accessed=int(B * (3 * s3_bytes + S * S * (item_e + 4)
                                + 4 * S * S * 4)))

    kernel = functools.partial(_mfvi_kernel, max_iter=max_iter)
    out_sds = jax.ShapeDtypeStruct((B, S, S), jnp.float32)
    lq0, lq1, q0, q1 = pl.pallas_call(
        kernel,
        out_shape=(out_sds, out_sds, out_sds, out_sds),
        grid_spec=pltpu.PrefetchScalarGridSpec(
            num_scalar_prefetch=0,
            grid=grid,
            in_specs=[spec3, spec4, spec4, spec4, spec3],
            out_specs=[spec3, spec3, spec3, spec3]),
        compiler_params=pltpu.CompilerParams(
            dimension_semantics=("parallel",),
            vmem_limit_bytes=vmem_limit),
        cost_estimate=cost,
    )(s_edge, s_sib, s_cop, s_grd, mask_f)

    marginals = jnp.stack([q0, q1], axis=-1)           # [B, S, S, 2]
    if target is None:
        return marginals
    # loss = -logQ.gather(-1, target)[mask].sum() / mask.sum()
    gathered = jnp.where(target.astype(jnp.int32) == 1, lq1, lq0)
    n_tok = jnp.sum(mask_f)
    loss = -jnp.sum(jnp.where(mask.astype(bool), gathered, 0.0)) / n_tok
    return loss, marginals


def _ref_forward(s_edge, s_sib, s_cop, s_grd, mask, target=None, max_iter=3):
    """Direct jnp transcription of the PyTorch module (for verification)."""
    B, S, _ = mask.shape
    i = jnp.arange(S)
    hs = jnp.minimum(i[:, None], i[None, :])
    ms = jnp.maximum(i[:, None], i[None, :])
    mask_p = jnp.transpose(mask, (2, 1, 0))
    mask2o = mask_p[:, None, :, :] & mask_p[:, :, None, :]
    mask2o = mask2o & (hs[:, :, None] != i[None, None, :])[..., None]
    mask2o = mask2o & (ms[:, :, None] != i[None, None, :])[..., None]
    m2f = mask2o.astype(jnp.float32)
    s_edge_p = jnp.transpose(s_edge, (2, 1, 0))
    s_sib_p = jnp.transpose(s_sib, (2, 1, 3, 0)) * m2f
    s_cop_p = jnp.transpose(s_cop, (2, 1, 3, 0)) * m2f
    s_grd_p = jnp.transpose(s_grd, (2, 1, 3, 0)) * m2f
    q = jnp.zeros((2, S, S, B), jnp.float32)
    for _ in range(max_iter):
        q = jax.nn.softmax(q, axis=0)
        f = (q[1][:, None] * s_sib_p
             + jnp.transpose(q[1], (1, 0, 2))[None] * s_cop_p
             + q[1][None] * s_grd_p).sum(2)
        q = jnp.stack([jnp.zeros_like(q[0]), s_edge_p + f])
    logQ = jax.nn.log_softmax(jnp.transpose(q, (3, 2, 1, 0)), axis=-1)
    marginals = jnp.exp(logQ)
    if target is None:
        return marginals
    gathered = jnp.take_along_axis(logQ, target[..., None], axis=-1)[..., 0]
    loss = -jnp.sum(jnp.where(mask, gathered, 0.0)) / jnp.sum(mask)
    return loss, marginals


if __name__ == "__main__":
    # TODO(synk): .requires_grad_() / autograd hooks in the torch forward are
    # training-time bookkeeping with no effect on the forward math; not ported.
    B, S = 2, 8
    key = jax.random.PRNGKey(0)
    k1, k2, k3, k4, k5 = jax.random.split(key, 5)
    s_edge = jax.random.normal(k1, (B, S, S), jnp.float32)
    s_sib = jax.random.normal(k2, (B, S, S, S), jnp.float32)
    s_cop = jax.random.normal(k3, (B, S, S, S), jnp.float32)
    s_grd = jax.random.normal(k4, (B, S, S, S), jnp.float32)
    lens = jnp.array([8, 6])
    idx = jnp.arange(S)
    mask = ((idx[None, :, None] < lens[:, None, None]) &
            (idx[None, None, :] < lens[:, None, None]))
    target = (jax.random.uniform(k5, (B, S, S)) > 0.5).astype(jnp.int32)

    loss, marginals = mfvi_semantic_dependency(
        s_edge, s_sib, s_cop, s_grd, mask, target=target, max_iter=3)
    jax.block_until_ready((loss, marginals))

    loss_ref, marg_ref = _ref_forward(
        s_edge, s_sib, s_cop, s_grd, mask, target=target, max_iter=3)
    np.testing.assert_allclose(np.asarray(marginals), np.asarray(marg_ref),
                               rtol=1e-4, atol=1e-5)
    np.testing.assert_allclose(np.asarray(loss), np.asarray(loss_ref),
                               rtol=1e-4, atol=1e-5)
    print("KERNEL_OK")
</pallas_src>

<mosaic_0001>
module attributes {stable_mosaic.version = 11 : i64} {
  func.func @_mfvi_kernel(%arg0: i32, %arg1: memref<2x8x8xf32, #tpu.memory_space<vmem>>, %arg2: memref<2x8x8x8xf32, #tpu.memory_space<vmem>>, %arg3: memref<2x8x8x8xf32, #tpu.memory_space<vmem>>, %arg4: memref<2x8x8x8xf32, #tpu.memory_space<vmem>>, %arg5: memref<2x8x8xf32, #tpu.memory_space<vmem>>, %arg6: memref<2x8x8xf32, #tpu.memory_space<vmem>>, %arg7: memref<2x8x8xf32, #tpu.memory_space<vmem>>, %arg8: memref<2x8x8xf32, #tpu.memory_space<vmem>>, %arg9: memref<2x8x8xf32, #tpu.memory_space<vmem>>) attributes {dimension_semantics = [#tpu.dimension_semantics<parallel>], iteration_bounds = array<i64: 1>, scalar_prefetch = 0 : i64, scratch_operands = 0 : i64, tpu.core_type = #tpu.core_type<tc>, window_params = [{transform_indices = @transform_0, window_bounds = array<i64: 2, 8, 8>}, {transform_indices = @transform_1, window_bounds = array<i64: 2, 8, 8, 8>}, {transform_indices = @transform_2, window_bounds = array<i64: 2, 8, 8, 8>}, {transform_indices = @transform_3, window_bounds = array<i64: 2, 8, 8, 8>}, {transform_indices = @transform_4, window_bounds = array<i64: 2, 8, 8>}, {transform_indices = @transform_5, window_bounds = array<i64: 2, 8, 8>}, {transform_indices = @transform_6, window_bounds = array<i64: 2, 8, 8>}, {transform_indices = @transform_7, window_bounds = array<i64: 2, 8, 8>}, {transform_indices = @transform_8, window_bounds = array<i64: 2, 8, 8>}]} {
    %0 = tpu.iota {dimensions = array<i32: 0>} : vector<8x8xi32>
    %1 = tpu.iota {dimensions = array<i32: 1>} : vector<8x8xi32>
    %2 = arith.cmpi ne, %0, %1 : vector<8x8xi32>
    %3 = arith.extui %2 : vector<8x8xi1> to vector<8x8xi32>
    %4 = arith.sitofp %3 : vector<8x8xi32> to vector<8x8xf32>
    %c0 = arith.constant 0 : index
    %c0_0 = arith.constant 0 : index
    %c0_1 = arith.constant 0 : index
    %5 = vector.load %arg1[%c0, %c0_0, %c0_1] : memref<2x8x8xf32, #tpu.memory_space<vmem>>, vector<1x8x8xf32>
    %6 = vector.shape_cast %5 : vector<1x8x8xf32> to vector<8x8xf32>
    %c0_2 = arith.constant 0 : index
    %c0_3 = arith.constant 0 : index
    %c0_4 = arith.constant 0 : index
    %7 = vector.load %arg5[%c0_2, %c0_3, %c0_4] : memref<2x8x8xf32, #tpu.memory_space<vmem>>, vector<1x8x8xf32>
    %8 = vector.shape_cast %7 : vector<1x8x8xf32> to vector<8x8xf32>
    %c0_5 = arith.constant 0 : index
    %c0_6 = arith.constant 0 : index
    %c0_7 = arith.constant 0 : index
    %c0_8 = arith.constant 0 : index
    %9 = vector.load %arg2[%c0_5, %c0_6, %c0_7, %c0_8] : memref<2x8x8x8xf32, #tpu.memory_space<vmem>>, vector<1x8x8x8xf32>
    %10 = vector.shape_cast %9 : vector<1x8x8x8xf32> to vector<8x8x8xf32>
    %c0_9 = arith.constant 0 : index
    %c0_10 = arith.constant 0 : index
    %c0_11 = arith.constant 0 : index
    %c0_12 = arith.constant 0 : index
    %11 = vector.load %arg3[%c0_9, %c0_10, %c0_11, %c0_12] : memref<2x8x8x8xf32, #tpu.memory_space<vmem>>, vector<1x8x8x8xf32>
    %12 = vector.shape_cast %11 : vector<1x8x8x8xf32> to vector<8x8x8xf32>
    %c0_13 = arith.constant 0 : index
    %c0_14 = arith.constant 0 : index
    %c0_15 = arith.constant 0 : index
    %c0_16 = arith.constant 0 : index
    %13 = vector.load %arg4[%c0_13, %c0_14, %c0_15, %c0_16] : memref<2x8x8x8xf32, #tpu.memory_space<vmem>>, vector<1x8x8x8xf32>
    %14 = vector.shape_cast %13 : vector<1x8x8x8xf32> to vector<8x8x8xf32>
    %15 = tpu.transpose %8, [1, 0] : vector<8x8xf32> -> vector<8x8xf32>
    %16 = arith.mulf %15, %4 : vector<8x8xf32>
    %cst = arith.constant 0.000000e+00 : f32
    %17 = vector.broadcast %cst : f32 to vector<8x8xf32>
    %cst_17 = arith.constant 0.000000e+00 : f32
    %18 = vector.broadcast %cst_17 : f32 to vector<8x8xf32>
    %19 = arith.subf %18, %17 : vector<8x8xf32>
    %20 = math.exp %19 : vector<8x8xf32>
    %cst_18 = arith.constant 1.000000e+00 : f32
    %21 = vector.broadcast %cst_18 : f32 to vector<8x8xf32>
    %22 = arith.addf %21, %20 : vector<8x8xf32>
    %cst_19 = arith.constant 1.000000e+00 : f32
    %23 = vector.broadcast %cst_19 : f32 to vector<8x8xf32>
    %24 = arith.divf %23, %22 : vector<8x8xf32>
    %25 = tpu.transpose %24, [1, 0] : vector<8x8xf32> -> vector<8x8xf32>
    %26 = arith.mulf %25, %16 : vector<8x8xf32>
    %27 = arith.mulf %24, %4 : vector<8x8xf32>
    %28 = arith.mulf %25, %4 : vector<8x8xf32>
    %29 = vector.shape_cast %26 : vector<8x8xf32> to vector<1x8x8xf32>
    %30 = vector.broadcast %29 : vector<1x8x8xf32> to vector<8x8x8xf32>
    %31 = arith.mulf %10, %30 : vector<8x8x8xf32>
    %32 = vector.shape_cast %4 : vector<8x8xf32> to vector<8x1x8xf32>
    %33 = vector.broadcast %32 : vector<8x1x8xf32> to vector<8x8x8xf32>
    %34 = arith.mulf %31, %33 : vector<8x8x8xf32>
    %cst_20 = arith.constant dense<0.000000e+00> : vector<8x8xf32>
    %35 = vector.multi_reduction <add>, %34, %cst_20 [2] : vector<8x8x8xf32> to vector<8x8xf32>
    %36 = vector.shape_cast %27 : vector<8x8xf32> to vector<8x1x8xf32>
    %37 = vector.broadcast %36 : vector<8x1x8xf32> to vector<8x8x8xf32>
    %38 = arith.mulf %12, %37 : vector<8x8x8xf32>
    %39 = vector.shape_cast %28 : vector<8x8xf32> to vector<8x1x8xf32>
    %40 = vector.broadcast %39 : vector<8x1x8xf32> to vector<8x8x8xf32>
    %41 = arith.mulf %14, %40 : vector<8x8x8xf32>
    %42 = arith.addf %38, %41 : vector<8x8x8xf32>
    %43 = vector.shape_cast %16 : vector<8x8xf32> to vector<1x8x8xf32>
    %44 = vector.broadcast %43 : vector<1x8x8xf32> to vector<8x8x8xf32>
    %45 = arith.mulf %42, %44 : vector<8x8x8xf32>
    %cst_21 = arith.constant dense<0.000000e+00> : vector<8x8xf32>
    %46 = vector.multi_reduction <add>, %45, %cst_21 [2] : vector<8x8x8xf32> to vector<8x8xf32>
    %47 = arith.addf %35, %46 : vector<8x8xf32>
    %48 = arith.mulf %8, %47 : vector<8x8xf32>
    %49 = arith.addf %6, %48 : vector<8x8xf32>
    %cst_22 = arith.constant 0.000000e+00 : f32
    %50 = vector.broadcast %cst_22 : f32 to vector<8x8xf32>
    %51 = arith.subf %50, %49 : vector<8x8xf32>
    %52 = math.exp %51 : vector<8x8xf32>
    %cst_23 = arith.constant 1.000000e+00 : f32
    %53 = vector.broadcast %cst_23 : f32 to vector<8x8xf32>
    %54 = arith.addf %53, %52 : vector<8x8xf32>
    %cst_24 = arith.constant 1.000000e+00 : f32
    %55 = vector.broadcast %cst_24 : f32 to vector<8x8xf32>
    %56 = arith.divf %55, %54 : vector<8x8xf32>
    %57 = tpu.transpose %56, [1, 0] : vector<8x8xf32> -> vector<8x8xf32>
    %58 = arith.mulf %57, %16 : vector<8x8xf32>
    %59 = arith.mulf %56, %4 : vector<8x8xf32>
    %60 = arith.mulf %57, %4 : vector<8x8xf32>
    %61 = vector.shape_cast %58 : vector<8x8xf32> to vector<1x8x8xf32>
    %62 = vector.broadcast %61 : vector<1x8x8xf32> to vector<8x8x8xf32>
    %63 = arith.mulf %10, %62 : vector<8x8x8xf32>
    %64 = vector.shape_cast %4 : vector<8x8xf32> to vector<8x1x8xf32>
    %65 = vector.broadcast %64 : vector<8x1x8xf32> to vector<8x8x8xf32>
    %66 = arith.mulf %63, %65 : vector<8x8x8xf32>
    %cst_25 = arith.constant dense<0.000000e+00> : vector<8x8xf32>
    %67 = vector.multi_reduction <add>, %66, %cst_25 [2] : vector<8x8x8xf32> to vector<8x8xf32>
    %68 = vector.shape_cast %59 : vector<8x8xf32> to vector<8x1x8xf32>
    %69 = vector.broadcast %68 : vector<8x1x8xf32> to vector<8x8x8xf32>
    %70 = arith.mulf %12, %69 : vector<8x8x8xf32>
    %71 = vector.shape_cast %60 : vector<8x8xf32> to vector<8x1x8xf32>
    %72 = vector.broadcast %71 : vector<8x1x8xf32> to vector<8x8x8xf32>
    %73 = arith.mulf %14, %72 : vector<8x8x8xf32>
    %74 = arith.addf %70, %73 : vector<8x8x8xf32>
    %75 = vector.shape_cast %16 : vector<8x8xf32> to vector<1x8x8xf32>
    %76 = vector.broadcast %75 : vector<1x8x8xf32> to vector<8x8x8xf32>
    %77 = arith.mulf %74, %76 : vector<8x8x8xf32>
    %cst_26 = arith.constant dense<0.000000e+00> : vector<8x8xf32>
    %78 = vector.multi_reduction <add>, %77, %cst_26 [2] : vector<8x8x8xf32> to vector<8x8xf32>
    %79 = arith.addf %67, %78 : vector<8x8xf32>
    %80 = arith.mulf %8, %79 : vector<8x8xf32>
    %81 = arith.addf %6, %80 : vector<8x8xf32>
    %cst_27 = arith.constant 0.000000e+00 : f32
    %82 = vector.broadcast %cst_27 : f32 to vector<8x8xf32>
    %83 = arith.subf %82, %81 : vector<8x8xf32>
    %84 = math.exp %83 : vector<8x8xf32>
    %cst_28 = arith.constant 1.000000e+00 : f32
    %85 = vector.broadcast %cst_28 : f32 to vector<8x8xf32>
    %86 = arith.addf %85, %84 : vector<8x8xf32>
    %cst_29 = arith.constant 1.000000e+00 : f32
    %87 = vector.broadcast %cst_29 : f32 to vector<8x8xf32>
    %88 = arith.divf %87, %86 : vector<8x8xf32>
    %89 = tpu.transpose %88, [1, 0] : vector<8x8xf32> -> vector<8x8xf32>
    %90 = arith.mulf %89, %16 : vector<8x8xf32>
    %91 = arith.mulf %88, %4 : vector<8x8xf32>
    %92 = arith.mulf %89, %4 : vector<8x8xf32>
    %93 = vector.shape_cast %90 : vector<8x8xf32> to vector<1x8x8xf32>
    %94 = vector.broadcast %93 : vector<1x8x8xf32> to vector<8x8x8xf32>
    %95 = arith.mulf %10, %94 : vector<8x8x8xf32>
    %96 = vector.shape_cast %4 : vector<8x8xf32> to vector<8x1x8xf32>
    %97 = vector.broadcast %96 : vector<8x1x8xf32> to vector<8x8x8xf32>
    %98 = arith.mulf %95, %97 : vector<8x8x8xf32>
    %cst_30 = arith.constant dense<0.000000e+00> : vector<8x8xf32>
    %99 = vector.multi_reduction <add>, %98, %cst_30 [2] : vector<8x8x8xf32> to vector<8x8xf32>
    %100 = vector.shape_cast %91 : vector<8x8xf32> to vector<8x1x8xf32>
    %101 = vector.broadcast %100 : vector<8x1x8xf32> to vector<8x8x8xf32>
    %102 = arith.mulf %12, %101 : vector<8x8x8xf32>
    %103 = vector.shape_cast %92 : vector<8x8xf32> to vector<8x1x8xf32>
    %104 = vector.broadcast %103 : vector<8x1x8xf32> to vector<8x8x8xf32>
    %105 = arith.mulf %14, %104 : vector<8x8x8xf32>
    %106 = arith.addf %102, %105 : vector<8x8x8xf32>
    %107 = vector.shape_cast %16 : vector<8x8xf32> to vector<1x8x8xf32>
    %108 = vector.broadcast %107 : vector<1x8x8xf32> to vector<8x8x8xf32>
    %109 = arith.mulf %106, %108 : vector<8x8x8xf32>
    %cst_31 = arith.constant dense<0.000000e+00> : vector<8x8xf32>
    %110 = vector.multi_reduction <add>, %109, %cst_31 [2] : vector<8x8x8xf32> to vector<8x8xf32>
    %111 = arith.addf %99, %110 : vector<8x8xf32>
    %112 = arith.mulf %8, %111 : vector<8x8xf32>
    %113 = arith.addf %6, %112 : vector<8x8xf32>
    %cst_32 = arith.constant 0.000000e+00 : f32
    %114 = vector.broadcast %cst_32 : f32 to vector<8x8xf32>
    %115 = arith.maximumf %113, %114 : vector<8x8xf32>
    %116 = math.absf %113 : vector<8x8xf32>
    %cst_33 = arith.constant 0.000000e+00 : f32
    %117 = vector.broadcast %cst_33 : f32 to vector<8x8xf32>
    %118 = arith.subf %117, %116 : vector<8x8xf32>
    %119 = math.exp %118 : vector<8x8xf32>
    %cst_34 = arith.constant 1.000000e+00 : f32
    %120 = vector.broadcast %cst_34 : f32 to vector<8x8xf32>
    %121 = arith.addf %120, %119 : vector<8x8xf32>
    %122 = math.log %121 : vector<8x8xf32>
    %123 = arith.addf %115, %122 : vector<8x8xf32>
    %cst_35 = arith.constant 0.000000e+00 : f32
    %124 = vector.broadcast %cst_35 : f32 to vector<8x8xf32>
    %125 = arith.subf %124, %123 : vector<8x8xf32>
    %126 = arith.subf %113, %123 : vector<8x8xf32>
    %c0_36 = arith.constant 0 : index
    %c0_37 = arith.constant 0 : index
    %c0_38 = arith.constant 0 : index
    %127 = vector.load %arg6[%c0_36, %c0_37, %c0_38] : memref<2x8x8xf32, #tpu.memory_space<vmem>>, vector<1x8x8xf32>
    %128 = vector.shape_cast %127 : vector<1x8x8xf32> to vector<8x8xf32>
    %129 = vector.shape_cast %125 : vector<8x8xf32> to vector<1x8x8xf32>
    tpu.vector_store %arg6[%c0_36, %c0_37, %c0_38], %129 {strides = array<i32>} : memref<2x8x8xf32, #tpu.memory_space<vmem>>, vector<1x8x8xf32>,
    %c0_39 = arith.constant 0 : index
    %c0_40 = arith.constant 0 : index
    %c0_41 = arith.constant 0 : index
    %130 = vector.load %arg7[%c0_39, %c0_40, %c0_41] : memref<2x8x8xf32, #tpu.memory_space<vmem>>, vector<1x8x8xf32>
    %131 = vector.shape_cast %130 : vector<1x8x8xf32> to vector<8x8xf32>
    %132 = vector.shape_cast %126 : vector<8x8xf32> to vector<1x8x8xf32>
    tpu.vector_store %arg7[%c0_39, %c0_40, %c0_41], %132 {strides = array<i32>} : memref<2x8x8xf32, #tpu.memory_space<vmem>>, vector<1x8x8xf32>,
    %133 = math.exp %125 : vector<8x8xf32>
    %c0_42 = arith.constant 0 : index
    %c0_43 = arith.constant 0 : index
    %c0_44 = arith.constant 0 : index
    %134 = vector.load %arg8[%c0_42, %c0_43, %c0_44] : memref<2x8x8xf32, #tpu.memory_space<vmem>>, vector<1x8x8xf32>
    %135 = vector.shape_cast %134 : vector<1x8x8xf32> to vector<8x8xf32>
    %136 = vector.shape_cast %133 : vector<8x8xf32> to vector<1x8x8xf32>
    tpu.vector_store %arg8[%c0_42, %c0_43, %c0_44], %136 {strides = array<i32>} : memref<2x8x8xf32, #tpu.memory_space<vmem>>, vector<1x8x8xf32>,
    %137 = math.exp %126 : vector<8x8xf32>
    %c0_45 = arith.constant 0 : index
    %c0_46 = arith.constant 0 : index
    %c0_47 = arith.constant 0 : index
    %138 = vector.load %arg9[%c0_45, %c0_46, %c0_47] : memref<2x8x8xf32, #tpu.memory_space<vmem>>, vector<1x8x8xf32>
    %139 = vector.shape_cast %138 : vector<1x8x8xf32> to vector<8x8xf32>
    %140 = vector.shape_cast %137 : vector<8x8xf32> to vector<1x8x8xf32>
    tpu.vector_store %arg9[%c0_45, %c0_46, %c0_47], %140 {strides = array<i32>} : memref<2x8x8xf32, #tpu.memory_space<vmem>>, vector<1x8x8xf32>,
    %c1 = arith.constant 1 : index
    %c0_48 = arith.constant 0 : index
    %c0_49 = arith.constant 0 : index
    %141 = vector.load %arg1[%c1, %c0_48, %c0_49] : memref<2x8x8xf32, #tpu.memory_space<vmem>>, vector<1x8x8xf32>
    %142 = vector.shape_cast %141 : vector<1x8x8xf32> to vector<8x8xf32>
    %c1_50 = arith.constant 1 : index
    %c0_51 = arith.constant 0 : index
    %c0_52 = arith.constant 0 : index
    %143 = vector.load %arg5[%c1_50, %c0_51, %c0_52] : memref<2x8x8xf32, #tpu.memory_space<vmem>>, vector<1x8x8xf32>
    %144 = vector.shape_cast %143 : vector<1x8x8xf32> to vector<8x8xf32>
    %c1_53 = arith.constant 1 : index
    %c0_54 = arith.constant 0 : index
    %c0_55 = arith.constant 0 : index
    %c0_56 = arith.constant 0 : index
    %145 = vector.load %arg2[%c1_53, %c0_54, %c0_55, %c0_56] : memref<2x8x8x8xf32, #tpu.memory_space<vmem>>, vector<1x8x8x8xf32>
    %146 = vector.shape_cast %145 : vector<1x8x8x8xf32> to vector<8x8x8xf32>
    %c1_57 = arith.constant 1 : index
    %c0_58 = arith.constant 0 : index
    %c0_59 = arith.constant 0 : index
    %c0_60 = arith.constant 0 : index
    %147 = vector.load %arg3[%c1_57, %c0_58, %c0_59, %c0_60] : memref<2x8x8x8xf32, #tpu.memory_space<vmem>>, vector<1x8x8x8xf32>
    %148 = vector.shape_cast %147 : vector<1x8x8x8xf32> to vector<8x8x8xf32>
    %c1_61 = arith.constant 1 : index
    %c0_62 = arith.constant 0 : index
    %c0_63 = arith.constant 0 : index
    %c0_64 = arith.constant 0 : index
    %149 = vector.load %arg4[%c1_61, %c0_62, %c0_63, %c0_64] : memref<2x8x8x8xf32, #tpu.memory_space<vmem>>, vector<1x8x8x8xf32>
    %150 = vector.shape_cast %149 : vector<1x8x8x8xf32> to vector<8x8x8xf32>
    %151 = tpu.transpose %144, [1, 0] : vector<8x8xf32> -> vector<8x8xf32>
    %152 = arith.mulf %151, %4 : vector<8x8xf32>
    %cst_65 = arith.constant 0.000000e+00 : f32
    %153 = vector.broadcast %cst_65 : f32 to vector<8x8xf32>
    %cst_66 = arith.constant 0.000000e+00 : f32
    %154 = vector.broadcast %cst_66 : f32 to vector<8x8xf32>
    %155 = arith.subf %154, %153 : vector<8x8xf32>
    %156 = math.exp %155 : vector<8x8xf32>
    %cst_67 = arith.constant 1.000000e+00 : f32
    %157 = vector.broadcast %cst_67 : f32 to vector<8x8xf32>
    %158 = arith.addf %157, %156 : vector<8x8xf32>
    %cst_68 = arith.constant 1.000000e+00 : f32
    %159 = vector.broadcast %cst_68 : f32 to vector<8x8xf32>
    %160 = arith.divf %159, %158 : vector<8x8xf32>
    %161 = tpu.transpose %160, [1, 0] : vector<8x8xf32> -> vector<8x8xf32>
    %162 = arith.mulf %161, %152 : vector<8x8xf32>
    %163 = arith.mulf %160, %4 : vector<8x8xf32>
    %164 = arith.mulf %161, %4 : vector<8x8xf32>
    %165 = vector.shape_cast %162 : vector<8x8xf32> to vector<1x8x8xf32>
    %166 = vector.broadcast %165 : vector<1x8x8xf32> to vector<8x8x8xf32>
    %167 = arith.mulf %146, %166 : vector<8x8x8xf32>
    %168 = vector.shape_cast %4 : vector<8x8xf32> to vector<8x1x8xf32>
    %169 = vector.broadcast %168 : vector<8x1x8xf32> to vector<8x8x8xf32>
    %170 = arith.mulf %167, %169 : vector<8x8x8xf32>
    %cst_69 = arith.constant dense<0.000000e+00> : vector<8x8xf32>
    %171 = vector.multi_reduction <add>, %170, %cst_69 [2] : vector<8x8x8xf32> to vector<8x8xf32>
    %172 = vector.shape_cast %163 : vector<8x8xf32> to vector<8x1x8xf32>
    %173 = vector.broadcast %172 : vector<8x1x8xf32> to vector<8x8x8xf32>
    %174 = arith.mulf %148, %173 : vector<8x8x8xf32>
    %175 = vector.shape_cast %164 : vector<8x8xf32> to vector<8x1x8xf32>
    %176 = vector.broadcast %175 : vector<8x1x8xf32> to vector<8x8x8xf32>
    %177 = arith.mulf %150, %176 : vector<8x8x8xf32>
    %178 = arith.addf %174, %177 : vector<8x8x8xf32>
    %179 = vector.shape_cast %152 : vector<8x8xf32> to vector<1x8x8xf32>
    %180 = vector.broadcast %179 : vector<1x8x8xf32> to vector<8x8x8xf32>
    %181 = arith.mulf %178, %180 : vector<8x8x8xf32>
    %cst_70 = arith.constant dense<0.000000e+00> : vector<8x8xf32>
    %182 = vector.multi_reduction <add>, %181, %cst_70 [2] : vector<8x8x8xf32> to vector<8x8xf32>
    %183 = arith.addf %171, %182 : vector<8x8xf32>
    %184 = arith.mulf %144, %183 : vector<8x8xf32>
    %185 = arith.addf %142, %184 : vector<8x8xf32>
    %cst_71 = arith.constant 0.000000e+00 : f32
    %186 = vector.broadcast %cst_71 : f32 to vector<8x8xf32>
    %187 = arith.subf %186, %185 : vector<8x8xf32>
    %188 = math.exp %187 : vector<8x8xf32>
    %cst_72 = arith.constant 1.000000e+00 : f32
    %189 = vector.broadcast %cst_72 : f32 to vector<8x8xf32>
    %190 = arith.addf %189, %188 : vector<8x8xf32>
    %cst_73 = arith.constant 1.000000e+00 : f32
    %191 = vector.broadcast %cst_73 : f32 to vector<8x8xf32>
    %192 = arith.divf %191, %190 : vector<8x8xf32>
    %193 = tpu.transpose %192, [1, 0] : vector<8x8xf32> -> vector<8x8xf32>
    %194 = arith.mulf %193, %152 : vector<8x8xf32>
    %195 = arith.mulf %192, %4 : vector<8x8xf32>
    %196 = arith.mulf %193, %4 : vector<8x8xf32>
    %197 = vector.shape_cast %194 : vector<8x8xf32> to vector<1x8x8xf32>
    %198 = vector.broadcast %197 : vector<1x8x8xf32> to vector<8x8x8xf32>
    %199 = arith.mulf %146, %198 : vector<8x8x8xf32>
    %200 = vector.shape_cast %4 : vector<8x8xf32> to vector<8x1x8xf32>
    %201 = vector.broadcast %200 : vector<8x1x8xf32> to vector<8x8x8xf32>
    %202 = arith.mulf %199, %201 : vector<8x8x8xf32>
    %cst_74 = arith.constant dense<0.000000e+00> : vector<8x8xf32>
    %203 = vector.multi_reduction <add>, %202, %cst_74 [2] : vector<8x8x8xf32> to vector<8x8xf32>
    %204 = vector.shape_cast %195 : vector<8x8xf32> to vector<8x1x8xf32>
    %205 = vector.broadcast %204 : vector<8x1x8xf32> to vector<8x8x8xf32>
    %206 = arith.mulf %148, %205 : vector<8x8x8xf32>
    %207 = vector.shape_cast %196 : vector<8x8xf32> to vector<8x1x8xf32>
    %208 = vector.broadcast %207 : vector<8x1x8xf32> to vector<8x8x8xf32>
    %209 = arith.mulf %150, %208 : vector<8x8x8xf32>
    %210 = arith.addf %206, %209 : vector<8x8x8xf32>
    %211 = vector.shape_cast %152 : vector<8x8xf32> to vector<1x8x8xf32>
    %212 = vector.broadcast %211 : vector<1x8x8xf32> to vector<8x8x8xf32>
    %213 = arith.mulf %210, %212 : vector<8x8x8xf32>
    %cst_75 = arith.constant dense<0.000000e+00> : vector<8x8xf32>
    %214 = vector.multi_reduction <add>, %213, %cst_75 [2] : vector<8x8x8xf32> to vector<8x8xf32>
    %215 = arith.addf %203, %214 : vector<8x8xf32>
    %216 = arith.mulf %144, %215 : vector<8x8xf32>
    %217 = arith.addf %142, %216 : vector<8x8xf32>
    %cst_76 = arith.constant 0.000000e+00 : f32
    %218 = vector.broadcast %cst_76 : f32 to vector<8x8xf32>
    %219 = arith.subf %218, %217 : vector<8x8xf32>
    %220 = math.exp %219 : vector<8x8xf32>
    %cst_77 = arith.constant 1.000000e+00 : f32
    %221 = vector.broadcast %cst_77 : f32 to vector<8x8xf32>
    %222 = arith.addf %221, %220 : vector<8x8xf32>
    %cst_78 = arith.constant 1.000000e+00 : f32
    %223 = vector.broadcast %cst_78 : f32 to vector<8x8xf32>
    %224 = arith.divf %223, %222 : vector<8x8xf32>
    %225 = tpu.transpose %224, [1, 0] : vector<8x8xf32> -> vector<8x8xf32>
    %226 = arith.mulf %225, %152 : vector<8x8xf32>
    %227 = arith.mulf %224, %4 : vector<8x8xf32>
    %228 = arith.mulf %225, %4 : vector<8x8xf32>
    %229 = vector.shape_cast %226 : vector<8x8xf32> to vector<1x8x8xf32>
    %230 = vector.broadcast %229 : vector<1x8x8xf32> to vector<8x8x8xf32>
    %231 = arith.mulf %146, %230 : vector<8x8x8xf32>
    %232 = vector.shape_cast %4 : vector<8x8xf32> to vector<8x1x8xf32>
    %233 = vector.broadcast %232 : vector<8x1x8xf32> to vector<8x8x8xf32>
    %234 = arith.mulf %231, %233 : vector<8x8x8xf32>
    %cst_79 = arith.constant dense<0.000000e+00> : vector<8x8xf32>
    %235 = vector.multi_reduction <add>, %234, %cst_79 [2] : vector<8x8x8xf32> to vector<8x8xf32>
    %236 = vector.shape_cast %227 : vector<8x8xf32> to vector<8x1x8xf32>
    %237 = vector.broadcast %236 : vector<8x1x8xf32> to vector<8x8x8xf32>
    %238 = arith.mulf %148, %237 : vector<8x8x8xf32>
    %239 = vector.shape_cast %228 : vector<8x8xf32> to vector<8x1x8xf32>
    %240 = vector.broadcast %239 : vector<8x1x8xf32> to vector<8x8x8xf32>
    %241 = arith.mulf %150, %240 : vector<8x8x8xf32>
    %242 = arith.addf %238, %241 : vector<8x8x8xf32>
    %243 = vector.shape_cast %152 : vector<8x8xf32> to vector<1x8x8xf32>
    %244 = vector.broadcast %243 : vector<1x8x8xf32> to vector<8x8x8xf32>
    %245 = arith.mulf %242, %244 : vector<8x8x8xf32>
    %cst_80 = arith.constant dense<0.000000e+00> : vector<8x8xf32>
    %246 = vector.multi_reduction <add>, %245, %cst_80 [2] : vector<8x8x8xf32> to vector<8x8xf32>
    %247 = arith.addf %235, %246 : vector<8x8xf32>
    %248 = arith.mulf %144, %247 : vector<8x8xf32>
    %249 = arith.addf %142, %248 : vector<8x8xf32>
    %cst_81 = arith.constant 0.000000e+00 : f32
    %250 = vector.broadcast %cst_81 : f32 to vector<8x8xf32>
    %251 = arith.maximumf %249, %250 : vector<8x8xf32>
    %252 = math.absf %249 : vector<8x8xf32>
    %cst_82 = arith.constant 0.000000e+00 : f32
    %253 = vector.broadcast %cst_82 : f32 to vector<8x8xf32>
    %254 = arith.subf %253, %252 : vector<8x8xf32>
    %255 = math.exp %254 : vector<8x8xf32>
    %cst_83 = arith.constant 1.000000e+00 : f32
    %256 = vector.broadcast %cst_83 : f32 to vector<8x8xf32>
    %257 = arith.addf %256, %255 : vector<8x8xf32>
    %258 = math.log %257 : vector<8x8xf32>
    %259 = arith.addf %251, %258 : vector<8x8xf32>
    %cst_84 = arith.constant 0.000000e+00 : f32
    %260 = vector.broadcast %cst_84 : f32 to vector<8x8xf32>
    %261 = arith.subf %260, %259 : vector<8x8xf32>
    %262 = arith.subf %249, %259 : vector<8x8xf32>
    %c1_85 = arith.constant 1 : index
    %c0_86 = arith.constant 0 : index
    %c0_87 = arith.constant 0 : index
    %263 = vector.load %arg6[%c1_85, %c0_86, %c0_87] : memref<2x8x8xf32, #tpu.memory_space<vmem>>, vector<1x8x8xf32>
    %264 = vector.shape_cast %263 : vector<1x8x8xf32> to vector<8x8xf32>
    %265 = vector.shape_cast %261 : vector<8x8xf32> to vector<1x8x8xf32>
    tpu.vector_store %arg6[%c1_85, %c0_86, %c0_87], %265 {strides = array<i32>} : memref<2x8x8xf32, #tpu.memory_space<vmem>>, vector<1x8x8xf32>,
    %c1_88 = arith.constant 1 : index
    %c0_89 = arith.constant 0 : index
    %c0_90 = arith.constant 0 : index
    %266 = vector.load %arg7[%c1_88, %c0_89, %c0_90] : memref<2x8x8xf32, #tpu.memory_space<vmem>>, vector<1x8x8xf32>
    %267 = vector.shape_cast %266 : vector<1x8x8xf32> to vector<8x8xf32>
    %268 = vector.shape_cast %262 : vector<8x8xf32> to vector<1x8x8xf32>
    tpu.vector_store %arg7[%c1_88, %c0_89, %c0_90], %268 {strides = array<i32>} : memref<2x8x8xf32, #tpu.memory_space<vmem>>, vector<1x8x8xf32>,
    %269 = math.exp %261 : vector<8x8xf32>
    %c1_91 = arith.constant 1 : index
    %c0_92 = arith.constant 0 : index
    %c0_93 = arith.constant 0 : index
    %270 = vector.load %arg8[%c1_91, %c0_92, %c0_93] : memref<2x8x8xf32, #tpu.memory_space<vmem>>, vector<1x8x8xf32>
    %271 = vector.shape_cast %270 : vector<1x8x8xf32> to vector<8x8xf32>
    %272 = vector.shape_cast %269 : vector<8x8xf32> to vector<1x8x8xf32>
    tpu.vector_store %arg8[%c1_91, %c0_92, %c0_93], %272 {strides = array<i32>} : memref<2x8x8xf32, #tpu.memory_space<vmem>>, vector<1x8x8xf32>,
    %273 = math.exp %262 : vector<8x8xf32>
    %c1_94 = arith.constant 1 : index
    %c0_95 = arith.constant 0 : index
    %c0_96 = arith.constant 0 : index
    %274 = vector.load %arg9[%c1_94, %c0_95, %c0_96] : memref<2x8x8xf32, #tpu.memory_space<vmem>>, vector<1x8x8xf32>
    %275 = vector.shape_cast %274 : vector<1x8x8xf32> to vector<8x8xf32>
    %276 = vector.shape_cast %273 : vector<8x8xf32> to vector<1x8x8xf32>
    tpu.vector_store %arg9[%c1_94, %c0_95, %c0_96], %276 {strides = array<i32>} : memref<2x8x8xf32, #tpu.memory_space<vmem>>, vector<1x8x8xf32>,
    return
  }
  func.func @transform_0(%arg0: i32) -> (i32, i32, i32) {
    %c0_i32 = arith.constant 0 : i32
    %c0_i32_0 = arith.constant 0 : i32
    %c0_i32_1 = arith.constant 0 : i32
    return %arg0, %c0_i32, %c0_i32_0 : i32, i32, i32
  }
  func.func @transform_1(%arg0: i32) -> (i32, i32, i32, i32) {
    %c0_i32 = arith.constant 0 : i32
    %c0_i32_0 = arith.constant 0 : i32
    %c0_i32_1 = arith.constant 0 : i32
    %c0_i32_2 = arith.constant 0 : i32
    return %arg0, %c0_i32, %c0_i32_0, %c0_i32_1 : i32, i32, i32, i32
  }
  func.func @transform_2(%arg0: i32) -> (i32, i32, i32, i32) {
    %c0_i32 = arith.constant 0 : i32
    %c0_i32_0 = arith.constant 0 : i32
    %c0_i32_1 = arith.constant 0 : i32
    %c0_i32_2 = arith.constant 0 : i32
    return %arg0, %c0_i32, %c0_i32_0, %c0_i32_1 : i32, i32, i32, i32
  }
  func.func @transform_3(%arg0: i32) -> (i32, i32, i32, i32) {
    %c0_i32 = arith.constant 0 : i32
    %c0_i32_0 = arith.constant 0 : i32
    %c0_i32_1 = arith.constant 0 : i32
    %c0_i32_2 = arith.constant 0 : i32
    return %arg0, %c0_i32, %c0_i32_0, %c0_i32_1 : i32, i32, i32, i32
  }
  func.func @transform_4(%arg0: i32) -> (i32, i32, i32) {
    %c0_i32 = arith.constant 0 : i32
    %c0_i32_0 = arith.constant 0 : i32
    %c0_i32_1 = arith.constant 0 : i32
    return %arg0, %c0_i32, %c0_i32_0 : i32, i32, i32
  }
  func.func @transform_5(%arg0: i32) -> (i32, i32, i32) {
    %c0_i32 = arith.constant 0 : i32
    %c0_i32_0 = arith.constant 0 : i32
    %c0_i32_1 = arith.constant 0 : i32
    return %arg0, %c0_i32, %c0_i32_0 : i32, i32, i32
  }
  func.func @transform_6(%arg0: i32) -> (i32, i32, i32) {
    %c0_i32 = arith.constant 0 : i32
    %c0_i32_0 = arith.constant 0 : i32
    %c0_i32_1 = arith.constant 0 : i32
    return %arg0, %c0_i32, %c0_i32_0 : i32, i32, i32
  }
  func.func @transform_7(%arg0: i32) -> (i32, i32, i32) {
    %c0_i32 = arith.constant 0 : i32
    %c0_i32_0 = arith.constant 0 : i32
    %c0_i32_1 = arith.constant 0 : i32
    return %arg0, %c0_i32, %c0_i32_0 : i32, i32, i32
  }
  func.func @transform_8(%arg0: i32) -> (i32, i32, i32) {
    %c0_i32 = arith.constant 0 : i32
    %c0_i32_0 = arith.constant 0 : i32
    %c0_i32_1 = arith.constant 0 : i32
    return %arg0, %c0_i32, %c0_i32_0 : i32, i32, i32
  }
}

</mosaic_0001>

<llo_original>
// kernel: tpu_custom_call.1
$region0: #{tpu_custom_call.1}
  #allocation0 [shape = 'u32[]', space=smem, size = 0x4, offset = 0x4, fixed_abs, tag = 'smem constant byte address 0x4 - core index']
  #allocation1 [shape = 'u32[144,128]{1,0:T(1,128)}', space=vmem, size = 0x12000, scoped, tag = 'internal scratch']
  %s0 = inlined_call_operand.hbm [shape: f32[2,8,8], index: 0, kind: input, shape index: {}]
  %s1 = inlined_call_operand.hbm [shape: f32[2,8,8,8], index: 1, kind: input, shape index: {}]
  %s2 = inlined_call_operand.hbm [shape: f32[2,8,8,8], index: 2, kind: input, shape index: {}]
  %s3 = inlined_call_operand.hbm [shape: f32[2,8,8,8], index: 3, kind: input, shape index: {}]
  %s4 = inlined_call_operand.hbm [shape: f32[2,8,8], index: 4, kind: input, shape index: {}]
  %s5 = inlined_call_operand.hbm [shape: f32[2,8,8], index: 5, kind: output, shape index: {0}]
  %s6 = inlined_call_operand.hbm [shape: f32[2,8,8], index: 6, kind: output, shape index: {1}]
  %s7 = inlined_call_operand.hbm [shape: f32[2,8,8], index: 7, kind: output, shape index: {2}]
  %s8 = inlined_call_operand.hbm [shape: f32[2,8,8], index: 8, kind: output, shape index: {3}]
  %9 = xla_tuple %s5, %s6, %s7, %s8
  %s10 = sld [smem:[#allocation0]]
  $region74: #{tpu_custom_call.1} parent=0
    _
  %s12 = ssub.s32 1, %s10
  %s13 = scalar_select 0, %s12, %s10
  $region1: #{tpu_custom_call.1} parent=0
    #allocation2 [shape = 'u8[8192]{0}', space=vmem, size = 0x2000, scoped, tag = 'input window, operand 0, single buffered']
    #allocation3 [shape = 's32[1]{0}', space=sflag, size = 0x4, scoped, tag = 'scoped memory for tpu_custom_call.1']
    #allocation4 [shape = 's32[1]{0}', space=sflag, size = 0x4, scoped, tag = 'scoped memory for tpu_custom_call.1']
    #allocation5 [shape = 'u8[65536]{0}', space=vmem, size = 0x10000, scoped, tag = 'input window, operand 1, single buffered']
    #allocation6 [shape = 's32[1]{0}', space=sflag, size = 0x4, scoped, tag = 'scoped memory for tpu_custom_call.1']
    #allocation7 [shape = 'u8[65536]{0}', space=vmem, size = 0x10000, scoped, tag = 'input window, operand 2, single buffered']
    #allocation8 [shape = 'u8[65536]{0}', space=vmem, size = 0x10000, scoped, tag = 'input window, operand 3, single buffered']
    #allocation9 [shape = 's32[1]{0}', space=sflag, size = 0x4, scoped, tag = 'scoped memory for tpu_custom_call.1']
    #allocation10 [shape = 'u8[8192]{0}', space=vmem, size = 0x2000, scoped, tag = 'input window, operand 4, single buffered']
    #allocation11 [shape = 'u8[8192]{0}', space=vmem, size = 0x2000, scoped, tag = 'output window, operand 0, single buffered']
    #allocation12 [shape = 'u8[8192]{0}', space=vmem, size = 0x2000, scoped, tag = 'output window, operand 1, single buffered']
    #allocation13 [shape = 's32[1]{0}', space=sflag, size = 0x4, scoped, tag = 'scoped memory for tpu_custom_call.1']
    #allocation14 [shape = 'u8[8192]{0}', space=vmem, size = 0x2000, scoped, tag = 'output window, operand 2, single buffered']
    #allocation15 [shape = 'u8[8192]{0}', space=vmem, size = 0x2000, scoped, tag = 'output window, operand 3, single buffered']
    #allocation16 [shape = 's32[1]{0}', space=sflag, size = 0x4, scoped, tag = 'scoped memory for tpu_custom_call.1']
    %14 = vsyncpa [#allocation3], 0
    %15 = vsyncpa [#allocation6], 0
    %16 = vsyncpa [#allocation9], 0
    %17 = vsyncpa [#allocation4], 0
    %18 = vsyncpa [#allocation13], 0
    %19 = vsyncpa [#allocation16], 0
    // Predicated region
    $region2: #{tpu_custom_call.1} parent=1 // pred_check
      _
    $region3: #{tpu_custom_call.1} parent=1 // pred_check_branch
      %21 = sbr.rel (0) target = $region5
    $region4: #{tpu_custom_call.1} parent=1 // pred_region
      %s23 = ssub.s32 256, 256
      %24 = vsyncadd [#allocation3], %s23
      %s25 = sshll.u32 [#allocation2], 4
      %s26 = int_to_ptr.vmem [resolvable:$true] %s25
      %31 = dma.hbm_to_vmem [thread:$0]  %s0, 256, %s26, [#allocation3], 128, 128, 8
    $region5: #{tpu_custom_call.1} parent=1 // pred_fallthru
      _
    // Predicated region
    $region6: #{tpu_custom_call.1} parent=1 // pred_check
      _
    $region7: #{tpu_custom_call.1} parent=1 // pred_check_branch
      %33 = sbr.rel (0) target = $region9
    $region8: #{tpu_custom_call.1} parent=1 // pred_region
      %s35 = ssub.s32 2048, 2048
      %36 = vsyncadd [#allocation6], %s35
      %s37 = sshll.u32 [#allocation5], 4
      %s38 = int_to_ptr.vmem [resolvable:$true] %s37
      %43 = dma.hbm_to_vmem [thread:$0]  %s1, 2048, %s38, [#allocation6], 128, 128, 8
    $region9: #{tpu_custom_call.1} parent=1 // pred_fallthru
      _
    // Predicated region
    $region10: #{tpu_custom_call.1} parent=1 // pred_check
      _
    $region11: #{tpu_custom_call.1} parent=1 // pred_check_branch
      %45 = sbr.rel (0) target = $region13
    $region12: #{tpu_custom_call.1} parent=1 // pred_region
      %s47 = ssub.s32 2048, 2048
      %48 = vsyncadd [#allocation6], %s47
      %s49 = sshll.u32 [#allocation7], 4
      %s50 = int_to_ptr.vmem [resolvable:$true] %s49
      %55 = dma.hbm_to_vmem [thread:$0]  %s2, 2048, %s50, [#allocation6], 128, 128, 8
    $region13: #{tpu_custom_call.1} parent=1 // pred_fallthru
      _
    // Predicated region
    $region14: #{tpu_custom_call.1} parent=1 // pred_check
      _
    $region15: #{tpu_custom_call.1} parent=1 // pred_check_branch
      %57 = sbr.rel (0) target = $region17
    $region16: #{tpu_custom_call.1} parent=1 // pred_region
      %s59 = ssub.s32 2048, 2048
      %60 = vsyncadd [#allocation9], %s59
      %s61 = sshll.u32 [#allocation8], 4
      %s62 = int_to_ptr.vmem [resolvable:$true] %s61
      %67 = dma.hbm_to_vmem [thread:$0]  %s3, 2048, %s62, [#allocation9], 128, 128, 8
    $region17: #{tpu_custom_call.1} parent=1 // pred_fallthru
      _
    // Predicated region
    $region18: #{tpu_custom_call.1} parent=1 // pred_check
      _
    $region19: #{tpu_custom_call.1} parent=1 // pred_check_branch
      %69 = sbr.rel (0) target = $region21
    $region20: #{tpu_custom_call.1} parent=1 // pred_region
      %s71 = ssub.s32 256, 256
      %72 = vsyncadd [#allocation9], %s71
      %s73 = sshll.u32 [#allocation10], 4
      %s74 = int_to_ptr.vmem [resolvable:$true] %s73
      %79 = dma.hbm_to_vmem [thread:$0]  %s4, 256, %s74, [#allocation9], 128, 128, 8
    $region21: #{tpu_custom_call.1} parent=1 // pred_fallthru
      _
    // Predicated region
    $region22: #{tpu_custom_call.1} parent=1 // pred_check
      _
    $region23: #{tpu_custom_call.1} parent=1 // pred_check_branch
      %81 = sbr.rel (0) target = $region25
    $region24: #{tpu_custom_call.1} parent=1 // pred_region
      %82 = dma.done [#allocation3], 256
    $region25: #{tpu_custom_call.1} parent=1 // pred_fallthru
      _
    // Predicated region
    $region26: #{tpu_custom_call.1} parent=1 // pred_check
      _
    $region27: #{tpu_custom_call.1} parent=1 // pred_check_branch
      %84 = sbr.rel (0) target = $region29
    $region28: #{tpu_custom_call.1} parent=1 // pred_region
      %85 = dma.done [#allocation6], 2048
    $region29: #{tpu_custom_call.1} parent=1 // pred_fallthru
      _
    // Predicated region
    $region30: #{tpu_custom_call.1} parent=1 // pred_check
      _
    $region31: #{tpu_custom_call.1} parent=1 // pred_check_branch
      %87 = sbr.rel (0) target = $region33
    $region32: #{tpu_custom_call.1} parent=1 // pred_region
      %88 = dma.done [#allocation6], 2048
    $region33: #{tpu_custom_call.1} parent=1 // pred_fallthru
      _
    // Predicated region
    $region34: #{tpu_custom_call.1} parent=1 // pred_check
      _
    $region35: #{tpu_custom_call.1} parent=1 // pred_check_branch
      %90 = sbr.rel (0) target = $region37
    $region36: #{tpu_custom_call.1} parent=1 // pred_region
      %91 = dma.done [#allocation9], 2048
    $region37: #{tpu_custom_call.1} parent=1 // pred_fallthru
      _
    // Predicated region
    $region38: #{tpu_custom_call.1} parent=1 // pred_check
      _
    $region39: #{tpu_custom_call.1} parent=1 // pred_check_branch
      %93 = sbr.rel (0) target = $region41
    $region40: #{tpu_custom_call.1} parent=1 // pred_region
      %94 = dma.done [#allocation9], 256
    $region41: #{tpu_custom_call.1} parent=1 // pred_fallthru
      _
    %v95 = vlaneseq
    %v96 = vshrl.u32 %v95, 7
    %v97 = vlaneseq
    %v98 = vand.u32 %v97, 127
    %vm99 = vcmp.ne.s32.totalorder %v96, %v98
    %v100 = vsel %vm99, 1, 0
    %v101 = vcvt.s32.f32 %v100
    %v102 = vld [vmem:[#allocation2] sm:$0xff]
    %v103 = vld [vmem:[#allocation10] sm:$0xff]
    %v104 = vld [vmem:[#allocation5] sm:$0xff]
    %v105 = vld [vmem:[#allocation5 + $0x8] sm:$0xff]
    %v106 = vld [vmem:[#allocation5 + $0x10] sm:$0xff]
    %v107 = vld [vmem:[#allocation5 + $0x18] sm:$0xff]
    %v108 = vld [vmem:[#allocation5 + $0x20] sm:$0xff]
    %v109 = vld [vmem:[#allocation5 + $0x28] sm:$0xff]
    %v110 = vld [vmem:[#allocation5 + $0x30] sm:$0xff]
    %v111 = vld [vmem:[#allocation5 + $0x38] sm:$0xff]
    %v112 = vld [vmem:[#allocation7] sm:$0xff]
    %v113 = vld [vmem:[#allocation7 + $0x8] sm:$0xff]
    %v114 = vld [vmem:[#allocation7 + $0x10] sm:$0xff]
    %v115 = vld [vmem:[#allocation7 + $0x18] sm:$0xff]
    %v116 = vld [vmem:[#allocation7 + $0x20] sm:$0xff]
    %v117 = vld [vmem:[#allocation7 + $0x28] sm:$0xff]
    %v118 = vld [vmem:[#allocation7 + $0x30] sm:$0xff]
    %v119 = vld [vmem:[#allocation7 + $0x38] sm:$0xff]
    %v120 = vld [vmem:[#allocation8] sm:$0xff]
    %v121 = vld [vmem:[#allocation8 + $0x8] sm:$0xff]
    %v122 = vld [vmem:[#allocation8 + $0x10] sm:$0xff]
    %v123 = vld [vmem:[#allocation8 + $0x18] sm:$0xff]
    %v124 = vld [vmem:[#allocation8 + $0x20] sm:$0xff]
    %v125 = vld [vmem:[#allocation8 + $0x28] sm:$0xff]
    %v126 = vld [vmem:[#allocation8 + $0x30] sm:$0xff]
    %v127 = vld [vmem:[#allocation8 + $0x38] sm:$0xff]
    %128 = vxpose.xlu0.b32.start [1/16] %v103, 128
    %129 = vxpose.xlu0.b32.cont [2/16] 0.0, 128
    %130 = vxpose.xlu0.b32.cont [3/16] 0.0, 128
    %131 = vxpose.xlu0.b32.cont [4/16] 0.0, 128
    %132 = vxpose.xlu0.b32.cont [5/16] 0.0, 128
    %133 = vxpose.xlu0.b32.cont [6/16] 0.0, 128
    %134 = vxpose.xlu0.b32.cont [7/16] 0.0, 128
    %135 = vxpose.xlu0.b32.cont [8/16] 0.0, 128
    %136 = vxpose.xlu0.b32.cont [9/16] 0.0, 128
    %137 = vxpose.xlu0.b32.cont [10/16] 0.0, 128
    %138 = vxpose.xlu0.b32.cont [11/16] 0.0, 128
    %139 = vxpose.xlu0.b32.cont [12/16] 0.0, 128
    %140 = vxpose.xlu0.b32.cont [13/16] 0.0, 128
    %141 = vxpose.xlu0.b32.cont [14/16] 0.0, 128
    %142 = vxpose.xlu0.b32.cont [15/16] 0.0, 128
    %143 = vxpose.xlu0.b32.end [16/16] 0.0, 128
    %v144 = vpop.trf.xlu0
    %v145 = vpop.trf.xlu0
    %v146 = vpop.trf.xlu0
    %v147 = vpop.trf.xlu0
    %v148 = vpop.trf.xlu0
    %v149 = vpop.trf.xlu0
    %v150 = vpop.trf.xlu0
    %v151 = vpop.trf.xlu0
    %v152 = vpop.trf.xlu0
    %v153 = vpop.trf.xlu0
    %v154 = vpop.trf.xlu0
    %v155 = vpop.trf.xlu0
    %v156 = vpop.trf.xlu0
    %v157 = vpop.trf.xlu0
    %v158 = vpop.trf.xlu0
    %v159 = vpop.trf.xlu0
    %v160 = vmul.f32 %v144, %v101
    %161 = vxpose.xlu0.b32.start [1/16] 0.5, 128
    %162 = vxpose.xlu0.b32.cont [2/16] 0.0, 128
    %163 = vxpose.xlu0.b32.cont [3/16] 0.0, 128
    %164 = vxpose.xlu0.b32.cont [4/16] 0.0, 128
    %165 = vxpose.xlu0.b32.cont [5/16] 0.0, 128
    %166 = vxpose.xlu0.b32.cont [6/16] 0.0, 128
    %167 = vxpose.xlu0.b32.cont [7/16] 0.0, 128
    %168 = vxpose.xlu0.b32.cont [8/16] 0.0, 128
    %169 = vxpose.xlu0.b32.cont [9/16] 0.0, 128
    %170 = vxpose.xlu0.b32.cont [10/16] 0.0, 128
    %171 = vxpose.xlu0.b32.cont [11/16] 0.0, 128
    %172 = vxpose.xlu0.b32.cont [12/16] 0.0, 128
    %173 = vxpose.xlu0.b32.cont [13/16] 0.0, 128
    %174 = vxpose.xlu0.b32.cont [14/16] 0.0, 128
    %175 = vxpose.xlu0.b32.cont [15/16] 0.0, 128
    %176 = vxpose.xlu0.b32.end [16/16] 0.0, 128
    %v177 = vpop.trf.xlu0
    %v178 = vpop.trf.xlu0
    %v179 = vpop.trf.xlu0
    %v180 = vpop.trf.xlu0
    %v181 = vpop.trf.xlu0
    %v182 = vpop.trf.xlu0
    %v183 = vpop.trf.xlu0
    %v184 = vpop.trf.xlu0
    %v185 = vpop.trf.xlu0
    %v186 = vpop.trf.xlu0
    %v187 = vpop.trf.xlu0
    %v188 = vpop.trf.xlu0
    %v189 = vpop.trf.xlu0
    %v190 = vpop.trf.xlu0
    %v191 = vpop.trf.xlu0
    %v192 = vpop.trf.xlu0
    %v193 = vmul.f32 %v177, %v160
    %v194 = vmul.f32 %v101, 0.5
    %v195 = vmul.f32 %v177, %v101
    %v196 = vmul.f32 %v104, %v193
    %v197 = vmul.f32 %v105, %v193
    %v198 = vmul.f32 %v106, %v193
    %v199 = vmul.f32 %v107, %v193
    %v200 = vmul.f32 %v108, %v193
    %v201 = vmul.f32 %v109, %v193
    %v202 = vmul.f32 %v110, %v193
    %v203 = vmul.f32 %v111, %v193
    %v205 = vcombine.high %v101, %v101
    %v207 = vunpack.c.l.s4 1966171168
    %v208 = vunpack.c.0.s8 %v207
    %v209 = vlaneseq
    %v210 = vshrl.u32 %v209, 7
    %v211 = vsub.s32 %v208, %v210
    %v212 = vrot.slane %v101, %v211
    %v214 = vunpack.c.l.s4 1966171168
    %v215 = vunpack.c.0.s8 %v214
    %v216 = vlaneseq
    %v217 = vshrl.u32 %v216, 7
    %v218 = vsub.s32 %v215, %v217
    %v219 = vrot.slane %v205, %v218
    %v220 = vcombine.high %v212, %v212
    %v221 = vcombine.high %v219, %v219
    %v223 = vunpack.c.l.s4 1966171168
    %v224 = vunpack.c.0.s8 %v223
    %v225 = vlaneseq
    %v226 = vshrl.u32 %v225, 7
    %v227 = vsub.s32 %v224, %v226
    %v228 = vrot.slane %v212, %v227
    %v230 = vunpack.c.l.s4 1966171168
    %v231 = vunpack.c.0.s8 %v230
    %v232 = vlaneseq
    %v233 = vshrl.u32 %v232, 7
    %v234 = vsub.s32 %v231, %v233
    %v235 = vrot.slane %v219, %v234
    %v237 = vunpack.c.l.s4 1966171168
    %v238 = vunpack.c.0.s8 %v237
    %v239 = vlaneseq
    %v240 = vshrl.u32 %v239, 7
    %v241 = vsub.s32 %v238, %v240
    %v242 = vrot.slane %v220, %v241
    %v244 = vunpack.c.l.s4 1966171168
    %v245 = vunpack.c.0.s8 %v244
    %v246 = vlaneseq
    %v247 = vshrl.u32 %v246, 7
    %v248 = vsub.s32 %v245, %v247
    %v249 = vrot.slane %v221, %v248
    %v250 = vcombine.high %v228, %v228
    %v251 = vcombine.high %v235, %v235
    %v252 = vcombine.high %v242, %v242
    %v253 = vcombine.high %v249, %v249
    %v254 = vlaneseq
    %v255 = vshrl.u32 %v254, 7
    %v256 = vsub.s32 0, %v255
    %v257 = vrot.slane %v228, %v256
    %v258 = vlaneseq
    %v259 = vshrl.u32 %v258, 7
    %v260 = vsub.s32 0, %v259
    %v261 = vrot.slane %v242, %v260
    %v262 = vlaneseq
    %v263 = vshrl.u32 %v262, 7
    %v264 = vsub.s32 0, %v263
    %v265 = vrot.slane %v250, %v264
    %v266 = vlaneseq
    %v267 = vshrl.u32 %v266, 7
    %v268 = vsub.s32 0, %v267
    %v269 = vrot.slane %v252, %v268
    %v270 = vlaneseq
    %v271 = vshrl.u32 %v270, 7
    %v272 = vsub.s32 0, %v271
    %v273 = vrot.slane %v235, %v272
    %v274 = vlaneseq
    %v275 = vshrl.u32 %v274, 7
    %v276 = vsub.s32 0, %v275
    %v277 = vrot.slane %v249, %v276
    %v278 = vlaneseq
    %v279 = vshrl.u32 %v278, 7
    %v280 = vsub.s32 0, %v279
    %v281 = vrot.slane %v251, %v280
    %v282 = vlaneseq
    %v283 = vshrl.u32 %v282, 7
    %v284 = vsub.s32 0, %v283
    %v285 = vrot.slane %v253, %v284
    %v294 = vmul.f32 %v196, %v257
    %v295 = vmul.f32 %v197, %v261
    %v296 = vmul.f32 %v198, %v265
    %v297 = vmul.f32 %v199, %v269
    %v298 = vmul.f32 %v200, %v273
    %v299 = vmul.f32 %v201, %v277
    %v300 = vmul.f32 %v202, %v281
    %v301 = vmul.f32 %v203, %v285
    %vm302 = vcmask 64512
    %v303 = vsel %vm302, %v294, 0.0
    %304 = vadd.xlane.f32.xlu0 %v303
    %v305 = vpop.xlane.xlu0 %304
    %v306 = vsel %vm302, %v295, 0.0
    %307 = vadd.xlane.f32.xlu0 %v306
    %v308 = vpop.xlane.xlu0 %307
    %v309 = vsel %vm302, %v296, 0.0
    %310 = vadd.xlane.f32.xlu0 %v309
    %v311 = vpop.xlane.xlu0 %310
    %v312 = vsel %vm302, %v297, 0.0
    %313 = vadd.xlane.f32.xlu0 %v312
    %v314 = vpop.xlane.xlu0 %313
    %v315 = vsel %vm302, %v298, 0.0
    %316 = vadd.xlane.f32.xlu0 %v315
    %v317 = vpop.xlane.xlu0 %316
    %v318 = vsel %vm302, %v299, 0.0
    %319 = vadd.xlane.f32.xlu0 %v318
    %v320 = vpop.xlane.xlu0 %319
    %v321 = vsel %vm302, %v300, 0.0
    %322 = vadd.xlane.f32.xlu0 %v321
    %v323 = vpop.xlane.xlu0 %322
    %v324 = vsel %vm302, %v301, 0.0
    %325 = vadd.xlane.f32.xlu0 %v324
    %v326 = vpop.xlane.xlu0 %325
    %v328 = vcombine.high %v194, %v194
    %v330 = vunpack.c.l.s4 1966171168
    %v331 = vunpack.c.0.s8 %v330
    %v332 = vlaneseq
    %v333 = vshrl.u32 %v332, 7
    %v334 = vsub.s32 %v331, %v333
    %v335 = vrot.slane %v194, %v334
    %v337 = vunpack.c.l.s4 1966171168
    %v338 = vunpack.c.0.s8 %v337
    %v339 = vlaneseq
    %v340 = vshrl.u32 %v339, 7
    %v341 = vsub.s32 %v338, %v340
    %v342 = vrot.slane %v328, %v341
    %v343 = vcombine.high %v335, %v335
    %v344 = vcombine.high %v342, %v342
    %v346 = vunpack.c.l.s4 1966171168
    %v347 = vunpack.c.0.s8 %v346
    %v348 = vlaneseq
    %v349 = vshrl.u32 %v348, 7
    %v350 = vsub.s32 %v347, %v349
    %v351 = vrot.slane %v335, %v350
    %v353 = vunpack.c.l.s4 1966171168
    %v354 = vunpack.c.0.s8 %v353
    %v355 = vlaneseq
    %v356 = vshrl.u32 %v355, 7
    %v357 = vsub.s32 %v354, %v356
    %v358 = vrot.slane %v342, %v357
    %v360 = vunpack.c.l.s4 1966171168
    %v361 = vunpack.c.0.s8 %v360
    %v362 = vlaneseq
    %v363 = vshrl.u32 %v362, 7
    %v364 = vsub.s32 %v361, %v363
    %v365 = vrot.slane %v343, %v364
    %v367 = vunpack.c.l.s4 1966171168
    %v368 = vunpack.c.0.s8 %v367
    %v369 = vlaneseq
    %v370 = vshrl.u32 %v369, 7
    %v371 = vsub.s32 %v368, %v370
    %v372 = vrot.slane %v344, %v371
    %v373 = vcombine.high %v351, %v351
    %v374 = vcombine.high %v358, %v358
    %v375 = vcombine.high %v365, %v365
    %v376 = vcombine.high %v372, %v372
    %v377 = vlaneseq
    %v378 = vshrl.u32 %v377, 7
    %v379 = vsub.s32 0, %v378
    %v380 = vrot.slane %v351, %v379
    %v381 = vlaneseq
    %v382 = vshrl.u32 %v381, 7
    %v383 = vsub.s32 0, %v382
    %v384 = vrot.slane %v365, %v383
    %v385 = vlaneseq
    %v386 = vshrl.u32 %v385, 7
    %v387 = vsub.s32 0, %v386
    %v388 = vrot.slane %v373, %v387
    %v389 = vlaneseq
    %v390 = vshrl.u32 %v389, 7
    %v391 = vsub.s32 0, %v390
    %v392 = vrot.slane %v375, %v391
    %v393 = vlaneseq
    %v394 = vshrl.u32 %v393, 7
    %v395 = vsub.s32 0, %v394
    %v396 = vrot.slane %v358, %v395
    %v397 = vlaneseq
    %v398 = vshrl.u32 %v397, 7
    %v399 = vsub.s32 0, %v398
    %v400 = vrot.slane %v372, %v399
    %v401 = vlaneseq
    %v402 = vshrl.u32 %v401, 7
    %v403 = vsub.s32 0, %v402
    %v404 = vrot.slane %v374, %v403
    %v405 = vlaneseq
    %v406 = vshrl.u32 %v405, 7
    %v407 = vsub.s32 0, %v406
    %v408 = vrot.slane %v376, %v407
    %v417 = vmul.f32 %v112, %v380
    %v418 = vmul.f32 %v113, %v384
    %v419 = vmul.f32 %v114, %v388
    %v420 = vmul.f32 %v115, %v392
    %v421 = vmul.f32 %v116, %v396
    %v422 = vmul.f32 %v117, %v400
    %v423 = vmul.f32 %v118, %v404
    %v424 = vmul.f32 %v119, %v408
    %v426 = vcombine.high %v195, %v195
    %v428 = vunpack.c.l.s4 1966171168
    %v429 = vunpack.c.0.s8 %v428
    %v430 = vlaneseq
    %v431 = vshrl.u32 %v430, 7
    %v432 = vsub.s32 %v429, %v431
    %v433 = vrot.slane %v195, %v432
    %v435 = vunpack.c.l.s4 1966171168
    %v436 = vunpack.c.0.s8 %v435
    %v437 = vlaneseq
    %v438 = vshrl.u32 %v437, 7
    %v439 = vsub.s32 %v436, %v438
    %v440 = vrot.slane %v426, %v439
    %v441 = vcombine.high %v433, %v433
    %v442 = vcombine.high %v440, %v440
    %v444 = vunpack.c.l.s4 1966171168
    %v445 = vunpack.c.0.s8 %v444
    %v446 = vlaneseq
    %v447 = vshrl.u32 %v446, 7
    %v448 = vsub.s32 %v445, %v447
    %v449 = vrot.slane %v433, %v448
    %v451 = vunpack.c.l.s4 1966171168
    %v452 = vunpack.c.0.s8 %v451
    %v453 = vlaneseq
    %v454 = vshrl.u32 %v453, 7
    %v455 = vsub.s32 %v452, %v454
    %v456 = vrot.slane %v440, %v455
    %v458 = vunpack.c.l.s4 1966171168
    %v459 = vunpack.c.0.s8 %v458
    %v460 = vlaneseq
    %v461 = vshrl.u32 %v460, 7
    %v462 = vsub.s32 %v459, %v461
    %v463 = vrot.slane %v441, %v462
    %v465 = vunpack.c.l.s4 1966171168
    %v466 = vunpack.c.0.s8 %v465
    %v467 = vlaneseq
    %v468 = vshrl.u32 %v467, 7
    %v469 = vsub.s32 %v466, %v468
    %v470 = vrot.slane %v442, %v469
    %v471 = vcombine.high %v449, %v449
    %v472 = vcombine.high %v456, %v456
    %v473 = vcombine.high %v463, %v463
    %v474 = vcombine.high %v470, %v470
    %v475 = vlaneseq
    %v476 = vshrl.u32 %v475, 7
    %v477 = vsub.s32 0, %v476
    %v478 = vrot.slane %v449, %v477
    %v479 = vlaneseq
    %v480 = vshrl.u32 %v479, 7
    %v481 = vsub.s32 0, %v480
    %v482 = vrot.slane %v463, %v481
    %v483 = vlaneseq
    %v484 = vshrl.u32 %v483, 7
    %v485 = vsub.s32 0, %v484
    %v486 = vrot.slane %v471, %v485
    %v487 = vlaneseq
    %v488 = vshrl.u32 %v487, 7
    %v489 = vsub.s32 0, %v488
    %v490 = vrot.slane %v473, %v489
    %v491 = vlaneseq
    %v492 = vshrl.u32 %v491, 7
    %v493 = vsub.s32 0, %v492
    %v494 = vrot.slane %v456, %v493
    %v495 = vlaneseq
    %v496 = vshrl.u32 %v495, 7
    %v497 = vsub.s32 0, %v496
    %v498 = vrot.slane %v470, %v497
    %v499 = vlaneseq
    %v500 = vshrl.u32 %v499, 7
    %v501 = vsub.s32 0, %v500
    %v502 = vrot.slane %v472, %v501
    %v503 = vlaneseq
    %v504 = vshrl.u32 %v503, 7
    %v505 = vsub.s32 0, %v504
    %v506 = vrot.slane %v474, %v505
    %v515 = vmul.f32 %v120, %v478
    %v516 = vmul.f32 %v121, %v482
    %v517 = vmul.f32 %v122, %v486
    %v518 = vmul.f32 %v123, %v490
    %v519 = vmul.f32 %v124, %v494
    %v520 = vmul.f32 %v125, %v498
    %v521 = vmul.f32 %v126, %v502
    %v522 = vmul.f32 %v127, %v506
    %v523 = vadd.f32 %v417, %v515
    %v524 = vadd.f32 %v418, %v516
    %v525 = vadd.f32 %v419, %v517
    %v526 = vadd.f32 %v420, %v518
    %v527 = vadd.f32 %v421, %v519
    %v528 = vadd.f32 %v422, %v520
    %v529 = vadd.f32 %v423, %v521
    %v530 = vadd.f32 %v424, %v522
    %v531 = vmul.f32 %v523, %v160
    %v532 = vmul.f32 %v524, %v160
    %v533 = vmul.f32 %v525, %v160
    %v534 = vmul.f32 %v526, %v160
    %v535 = vmul.f32 %v527, %v160
    %v536 = vmul.f32 %v528, %v160
    %v537 = vmul.f32 %v529, %v160
    %v538 = vmul.f32 %v530, %v160
    %v539 = vsel %vm302, %v531, 0.0
    %540 = vadd.xlane.f32.xlu0 %v539
    %v541 = vpop.xlane.xlu0 %540
    %v542 = vsel %vm302, %v532, 0.0
    %543 = vadd.xlane.f32.xlu0 %v542
    %v544 = vpop.xlane.xlu0 %543
    %v545 = vsel %vm302, %v533, 0.0
    %546 = vadd.xlane.f32.xlu0 %v545
    %v547 = vpop.xlane.xlu0 %546
    %v548 = vsel %vm302, %v534, 0.0
    %549 = vadd.xlane.f32.xlu0 %v548
    %v550 = vpop.xlane.xlu0 %549
    %v551 = vsel %vm302, %v535, 0.0
    %552 = vadd.xlane.f32.xlu0 %v551
    %v553 = vpop.xlane.xlu0 %552
    %v554 = vsel %vm302, %v536, 0.0
    %555 = vadd.xlane.f32.xlu0 %v554
    %v556 = vpop.xlane.xlu0 %555
    %v557 = vsel %vm302, %v537, 0.0
    %558 = vadd.xlane.f32.xlu0 %v557
    %v559 = vpop.xlane.xlu0 %558
    %v560 = vsel %vm302, %v538, 0.0
    %561 = vadd.xlane.f32.xlu0 %v560
    %v562 = vpop.xlane.xlu0 %561
    %v563 = vadd.f32 %v305, %v541
    %v564 = vadd.f32 %v308, %v544
    %v565 = vadd.f32 %v311, %v547
    %v566 = vadd.f32 %v314, %v550
    %v567 = vadd.f32 %v317, %v553
    %v568 = vadd.f32 %v320, %v556
    %v569 = vadd.f32 %v323, %v559
    %v570 = vadd.f32 %v326, %v562
    %v579 = vlaneseq
    %v580 = vshrl.u32 %v579, 7
    %v581 = vsub.s32 %v98, %v580
    %v582 = vrot.slane %v563, %v581
    %v583 = vlaneseq
    %v584 = vshrl.u32 %v583, 7
    %v585 = vsub.s32 %v98, %v584
    %v586 = vrot.slane %v564, %v585
    %v587 = vlaneseq
    %v588 = vshrl.u32 %v587, 7
    %v589 = vsub.s32 %v98, %v588
    %v590 = vrot.slane %v565, %v589
    %v591 = vlaneseq
    %v592 = vshrl.u32 %v591, 7
    %v593 = vsub.s32 %v98, %v592
    %v594 = vrot.slane %v566, %v593
    %v595 = vlaneseq
    %v596 = vshrl.u32 %v595, 7
    %v597 = vsub.s32 %v98, %v596
    %v598 = vrot.slane %v567, %v597
    %v599 = vlaneseq
    %v600 = vshrl.u32 %v599, 7
    %v601 = vsub.s32 %v98, %v600
    %v602 = vrot.slane %v568, %v601
    %v603 = vlaneseq
    %v604 = vshrl.u32 %v603, 7
    %v605 = vsub.s32 %v98, %v604
    %v606 = vrot.slane %v569, %v605
    %v607 = vlaneseq
    %v608 = vshrl.u32 %v607, 7
    %v609 = vsub.s32 %v98, %v608
    %v610 = vrot.slane %v570, %v609
    %vm611 = vcmask 1041409
    %v612 = vsel %vm611, %v586, %v582
    %vm613 = vcmask 1042434
    %v614 = vsel %vm613, %v590, %v612
    %vm615 = vcmask 1043459
    %v616 = vsel %vm615, %v594, %v614
    %vm617 = vcmask 1044484
    %v618 = vsel %vm617, %v598, %v616
    %vm619 = vcmask 1045509
    %v620 = vsel %vm619, %v602, %v618
    %vm621 = vcmask 1046534
    %v622 = vsel %vm621, %v606, %v620
    %vm623 = vcmask 1047559
    %v624 = vsel %vm623, %v610, %v622
    %v626 = vmul.f32 %v103, %v624
    %v627 = vadd.f32 %v102, %v626
    %v628 = vsub.f32 0.0, %v627
    %v629 = vmul.f32 %v628, 1.442695
    %v630 = vpow.pop %v629
    %v631 = vadd.f32 %v630, 1.0
    %v632 = vrcp.pop %v631
    %v633 = vmul.f32 1.0, %v632
    %634 = vxpose.xlu0.b32.start [1/16] %v633, 128
    %635 = vxpose.xlu0.b32.cont [2/16] 0.0, 128
    %636 = vxpose.xlu0.b32.cont [3/16] 0.0, 128
    %637 = vxpose.xlu0.b32.cont [4/16] 0.0, 128
    %638 = vxpose.xlu0.b32.cont [5/16] 0.0, 128
    %639 = vxpose.xlu0.b32.cont [6/16] 0.0, 128
    %640 = vxpose.xlu0.b32.cont [7/16] 0.0, 128
    %641 = vxpose.xlu0.b32.cont [8/16] 0.0, 128
    %642 = vxpose.xlu0.b32.cont [9/16] 0.0, 128
    %643 = vxpose.xlu0.b32.cont [10/16] 0.0, 128
    %644 = vxpose.xlu0.b32.cont [11/16] 0.0, 128
    %645 = vxpose.xlu0.b32.cont [12/16] 0.0, 128
    %646 = vxpose.xlu0.b32.cont [13/16] 0.0, 128
    %647 = vxpose.xlu0.b32.cont [14/16] 0.0, 128
    %648 = vxpose.xlu0.b32.cont [15/16] 0.0, 128
    %649 = vxpose.xlu0.b32.end [16/16] 0.0, 128
    %v650 = vpop.trf.xlu0
    %v651 = vpop.trf.xlu0
    %v652 = vpop.trf.xlu0
    %v653 = vpop.trf.xlu0
    %v654 = vpop.trf.xlu0
    %v655 = vpop.trf.xlu0
    %v656 = vpop.trf.xlu0
    %v657 = vpop.trf.xlu0
    %v658 = vpop.trf.xlu0
    %v659 = vpop.trf.xlu0
    %v660 = vpop.trf.xlu0
    %v661 = vpop.trf.xlu0
    %v662 = vpop.trf.xlu0
    %v663 = vpop.trf.xlu0
    %v664 = vpop.trf.xlu0
    %v665 = vpop.trf.xlu0
    %v666 = vmul.f32 %v650, %v160
    %v667 = vmul.f32 %v633, %v101
    %v668 = vmul.f32 %v650, %v101
    %v669 = vmul.f32 %v104, %v666
    %v670 = vmul.f32 %v105, %v666
    %v671 = vmul.f32 %v106, %v666
    %v672 = vmul.f32 %v107, %v666
    %v673 = vmul.f32 %v108, %v666
    %v674 = vmul.f32 %v109, %v666
    %v675 = vmul.f32 %v110, %v666
    %v676 = vmul.f32 %v111, %v666
    %v677 = vmul.f32 %v669, %v257
    %v678 = vmul.f32 %v670, %v261
    %v679 = vmul.f32 %v671, %v265
    %v680 = vmul.f32 %v672, %v269
    %v681 = vmul.f32 %v673, %v273
    %v682 = vmul.f32 %v674, %v277
    %v683 = vmul.f32 %v675, %v281
    %v684 = vmul.f32 %v676, %v285
    %v685 = vsel %vm302, %v677, 0.0
    %686 = vadd.xlane.f32.xlu0 %v685
    %v687 = vpop.xlane.xlu0 %686
    %v688 = vsel %vm302, %v678, 0.0
    %689 = vadd.xlane.f32.xlu0 %v688
    %v690 = vpop.xlane.xlu0 %689
    %v691 = vsel %vm302, %v679, 0.0
    %692 = vadd.xlane.f32.xlu0 %v691
    %v693 = vpop.xlane.xlu0 %692
    %v694 = vsel %vm302, %v680, 0.0
    %695 = vadd.xlane.f32.xlu0 %v694
    %v696 = vpop.xlane.xlu0 %695
    %v697 = vsel %vm302, %v681, 0.0
    %698 = vadd.xlane.f32.xlu0 %v697
    %v699 = vpop.xlane.xlu0 %698
    %v700 = vsel %vm302, %v682, 0.0
    %701 = vadd.xlane.f32.xlu0 %v700
    %v702 = vpop.xlane.xlu0 %701
    %v703 = vsel %vm302, %v683, 0.0
    %704 = vadd.xlane.f32.xlu0 %v703
    %v705 = vpop.xlane.xlu0 %704
    %v706 = vsel %vm302, %v684, 0.0
    %707 = vadd.xlane.f32.xlu0 %v706
    %v708 = vpop.xlane.xlu0 %707
    %v710 = vcombine.high %v667, %v667
    %v712 = vunpack.c.l.s4 1966171168
    %v713 = vunpack.c.0.s8 %v712
    %v714 = vlaneseq
    %v715 = vshrl.u32 %v714, 7
    %v716 = vsub.s32 %v713, %v715
    %v717 = vrot.slane %v667, %v716
    %v719 = vunpack.c.l.s4 1966171168
    %v720 = vunpack.c.0.s8 %v719
    %v721 = vlaneseq
    %v722 = vshrl.u32 %v721, 7
    %v723 = vsub.s32 %v720, %v722
    %v724 = vrot.slane %v710, %v723
    %v725 = vcombine.high %v717, %v717
    %v726 = vcombine.high %v724, %v724
    %v728 = vunpack.c.l.s4 1966171168
    %v729 = vunpack.c.0.s8 %v728
    %v730 = vlaneseq
    %v731 = vshrl.u32 %v730, 7
    %v732 = vsub.s32 %v729, %v731
    %v733 = vrot.slane %v717, %v732
    %v735 = vunpack.c.l.s4 1966171168
    %v736 = vunpack.c.0.s8 %v735
    %v737 = vlaneseq
    %v738 = vshrl.u32 %v737, 7
    %v739 = vsub.s32 %v736, %v738
    %v740 = vrot.slane %v724, %v739
    %v742 = vunpack.c.l.s4 1966171168
    %v743 = vunpack.c.0.s8 %v742
    %v744 = vlaneseq
    %v745 = vshrl.u32 %v744, 7
    %v746 = vsub.s32 %v743, %v745
    %v747 = vrot.slane %v725, %v746
    %v749 = vunpack.c.l.s4 1966171168
    %v750 = vunpack.c.0.s8 %v749
    %v751 = vlaneseq
    %v752 = vshrl.u32 %v751, 7
    %v753 = vsub.s32 %v750, %v752
    %v754 = vrot.slane %v726, %v753
    %v755 = vcombine.high %v733, %v733
    %v756 = vcombine.high %v740, %v740
    %v757 = vcombine.high %v747, %v747
    %v758 = vcombine.high %v754, %v754
    %v759 = vlaneseq
    %v760 = vshrl.u32 %v759, 7
    %v761 = vsub.s32 0, %v760
    %v762 = vrot.slane %v733, %v761
    %v763 = vlaneseq
    %v764 = vshrl.u32 %v763, 7
    %v765 = vsub.s32 0, %v764
    %v766 = vrot.slane %v747, %v765
    %v767 = vlaneseq
    %v768 = vshrl.u32 %v767, 7
    %v769 = vsub.s32 0, %v768
    %v770 = vrot.slane %v755, %v769
    %v771 = vlaneseq
    %v772 = vshrl.u32 %v771, 7
    %v773 = vsub.s32 0, %v772
    %v774 = vrot.slane %v757, %v773
    %v775 = vlaneseq
    %v776 = vshrl.u32 %v775, 7
    %v777 = vsub.s32 0, %v776
    %v778 = vrot.slane %v740, %v777
    %v779 = vlaneseq
    %v780 = vshrl.u32 %v779, 7
    %v781 = vsub.s32 0, %v780
    %v782 = vrot.slane %v754, %v781
    %v783 = vlaneseq
    %v784 = vshrl.u32 %v783, 7
    %v785 = vsub.s32 0, %v784
    %v786 = vrot.slane %v756, %v785
    %v787 = vlaneseq
    %v788 = vshrl.u32 %v787, 7
    %v789 = vsub.s32 0, %v788
    %v790 = vrot.slane %v758, %v789
    %v799 = vmul.f32 %v112, %v762
    %v800 = vmul.f32 %v113, %v766
    %v801 = vmul.f32 %v114, %v770
    %v802 = vmul.f32 %v115, %v774
    %v803 = vmul.f32 %v116, %v778
    %v804 = vmul.f32 %v117, %v782
    %v805 = vmul.f32 %v118, %v786
    %v806 = vmul.f32 %v119, %v790
    %v808 = vcombine.high %v668, %v668
    %v810 = vunpack.c.l.s4 1966171168
    %v811 = vunpack.c.0.s8 %v810
    %v812 = vlaneseq
    %v813 = vshrl.u32 %v812, 7
    %v814 = vsub.s32 %v811, %v813
    %v815 = vrot.slane %v668, %v814
    %v817 = vunpack.c.l.s4 1966171168
    %v818 = vunpack.c.0.s8 %v817
    %v819 = vlaneseq
    %v820 = vshrl.u32 %v819, 7
    %v821 = vsub.s32 %v818, %v820
    %v822 = vrot.slane %v808, %v821
    %v823 = vcombine.high %v815, %v815
    %v824 = vcombine.high %v822, %v822
    %v826 = vunpack.c.l.s4 1966171168
    %v827 = vunpack.c.0.s8 %v826
    %v828 = vlaneseq
    %v829 = vshrl.u32 %v828, 7
    %v830 = vsub.s32 %v827, %v829
    %v831 = vrot.slane %v815, %v830
    %v833 = vunpack.c.l.s4 1966171168
    %v834 = vunpack.c.0.s8 %v833
    %v835 = vlaneseq
    %v836 = vshrl.u32 %v835, 7
    %v837 = vsub.s32 %v834, %v836
    %v838 = vrot.slane %v822, %v837
    %v840 = vunpack.c.l.s4 1966171168
    %v841 = vunpack.c.0.s8 %v840
    %v842 = vlaneseq
    %v843 = vshrl.u32 %v842, 7
    %v844 = vsub.s32 %v841, %v843
    %v845 = vrot.slane %v823, %v844
    %v847 = vunpack.c.l.s4 1966171168
    %v848 = vunpack.c.0.s8 %v847
    %v849 = vlaneseq
    %v850 = vshrl.u32 %v849, 7
    %v851 = vsub.s32 %v848, %v850
    %v852 = vrot.slane %v824, %v851
    %v853 = vcombine.high %v831, %v831
    %v854 = vcombine.high %v838, %v838
    %v855 = vcombine.high %v845, %v845
    %v856 = vcombine.high %v852, %v852
    %v857 = vlaneseq
    %v858 = vshrl.u32 %v857, 7
    %v859 = vsub.s32 0, %v858
    %v860 = vrot.slane %v831, %v859
    %v861 = vlaneseq
    %v862 = vshrl.u32 %v861, 7
    %v863 = vsub.s32 0, %v862
    %v864 = vrot.slane %v845, %v863
    %v865 = vlaneseq
    %v866 = vshrl.u32 %v865, 7
    %v867 = vsub.s32 0, %v866
    %v868 = vrot.slane %v853, %v867
    %v869 = vlaneseq
    %v870 = vshrl.u32 %v869, 7
    %v871 = vsub.s32 0, %v870
    %v872 = vrot.slane %v855, %v871
    %v873 = vlaneseq
    %v874 = vshrl.u32 %v873, 7
    %v875 = vsub.s32 0, %v874
    %v876 = vrot.slane %v838, %v875
    %v877 = vlaneseq
    %v878 = vshrl.u32 %v877, 7
    %v879 = vsub.s32 0, %v878
    %v880 = vrot.slane %v852, %v879
    %v881 = vlaneseq
    %v882 = vshrl.u32 %v881, 7
    %v883 = vsub.s32 0, %v882
    %v884 = vrot.slane %v854, %v883
    %v885 = vlaneseq
    %v886 = vshrl.u32 %v885, 7
    %v887 = vsub.s32 0, %v886
    %v888 = vrot.slane %v856, %v887
    %v897 = vmul.f32 %v120, %v860
    %v898 = vmul.f32 %v121, %v864
    %v899 = vmul.f32 %v122, %v868
    %v900 = vmul.f32 %v123, %v872
    %v901 = vmul.f32 %v124, %v876
    %v902 = vmul.f32 %v125, %v880
    %v903 = vmul.f32 %v126, %v884
    %v904 = vmul.f32 %v127, %v888
    %v905 = vadd.f32 %v799, %v897
    %v906 = vadd.f32 %v800, %v898
    %v907 = vadd.f32 %v801, %v899
    %v908 = vadd.f32 %v802, %v900
    %v909 = vadd.f32 %v803, %v901
    %v910 = vadd.f32 %v804, %v902
    %v911 = vadd.f32 %v805, %v903
    %v912 = vadd.f32 %v806, %v904
    %v913 = vmul.f32 %v905, %v160
    %v914 = vmul.f32 %v906, %v160
    %v915 = vmul.f32 %v907, %v160
    %v916 = vmul.f32 %v908, %v160
    %v917 = vmul.f32 %v909, %v160
    %v918 = vmul.f32 %v910, %v160
    %v919 = vmul.f32 %v911, %v160
    %v920 = vmul.f32 %v912, %v160
    %v921 = vsel %vm302, %v913, 0.0
    %922 = vadd.xlane.f32.xlu0 %v921
    %v923 = vpop.xlane.xlu0 %922
    %v924 = vsel %vm302, %v914, 0.0
    %925 = vadd.xlane.f32.xlu0 %v924
    %v926 = vpop.xlane.xlu0 %925
    %v927 = vsel %vm302, %v915, 0.0
    %928 = vadd.xlane.f32.xlu0 %v927
    %v929 = vpop.xlane.xlu0 %928
    %v930 = vsel %vm302, %v916, 0.0
    %931 = vadd.xlane.f32.xlu0 %v930
    %v932 = vpop.xlane.xlu0 %931
    %v933 = vsel %vm302, %v917, 0.0
    %934 = vadd.xlane.f32.xlu0 %v933
    %v935 = vpop.xlane.xlu0 %934
    %v936 = vsel %vm302, %v918, 0.0
    %937 = vadd.xlane.f32.xlu0 %v936
    %v938 = vpop.xlane.xlu0 %937
    %v939 = vsel %vm302, %v919, 0.0
    %940 = vadd.xlane.f32.xlu0 %v939
    %v941 = vpop.xlane.xlu0 %940
    %v942 = vsel %vm302, %v920, 0.0
    %943 = vadd.xlane.f32.xlu0 %v942
    %v944 = vpop.xlane.xlu0 %943
    %v945 = vadd.f32 %v687, %v923
    %v946 = vadd.f32 %v690, %v926
    %v947 = vadd.f32 %v693, %v929
    %v948 = vadd.f32 %v696, %v932
    %v949 = vadd.f32 %v699, %v935
    %v950 = vadd.f32 %v702, %v938
    %v951 = vadd.f32 %v705, %v941
    %v952 = vadd.f32 %v708, %v944
    %v961 = vlaneseq
    %v962 = vshrl.u32 %v961, 7
    %v963 = vsub.s32 %v98, %v962
    %v964 = vrot.slane %v945, %v963
    %v965 = vlaneseq
    %v966 = vshrl.u32 %v965, 7
    %v967 = vsub.s32 %v98, %v966
    %v968 = vrot.slane %v946, %v967
    %v969 = vlaneseq
    %v970 = vshrl.u32 %v969, 7
    %v971 = vsub.s32 %v98, %v970
    %v972 = vrot.slane %v947, %v971
    %v973 = vlaneseq
    %v974 = vshrl.u32 %v973, 7
    %v975 = vsub.s32 %v98, %v974
    %v976 = vrot.slane %v948, %v975
    %v977 = vlaneseq
    %v978 = vshrl.u32 %v977, 7
    %v979 = vsub.s32 %v98, %v978
    %v980 = vrot.slane %v949, %v979
    %v981 = vlaneseq
    %v982 = vshrl.u32 %v981, 7
    %v983 = vsub.s32 %v98, %v982
    %v984 = vrot.slane %v950, %v983
    %v985 = vlaneseq
    %v986 = vshrl.u32 %v985, 7
    %v987 = vsub.s32 %v98, %v986
    %v988 = vrot.slane %v951, %v987
    %v989 = vlaneseq
    %v990 = vshrl.u32 %v989, 7
    %v991 = vsub.s32 %v98, %v990
    %v992 = vrot.slane %v952, %v991
    %v993 = vsel %vm611, %v968, %v964
    %v994 = vsel %vm613, %v972, %v993
    %v995 = vsel %vm615, %v976, %v994
    %v996 = vsel %vm617, %v980, %v995
    %v997 = vsel %vm619, %v984, %v996
    %v998 = vsel %vm621, %v988, %v997
    %v999 = vsel %vm623, %v992, %v998
    %v1001 = vmul.f32 %v103, %v999
    %v1002 = vadd.f32 %v102, %v1001
    %v1003 = vsub.f32 0.0, %v1002
    %v1004 = vmul.f32 %v1003, 1.442695
    %v1005 = vpow.pop %v1004
    %v1006 = vadd.f32 %v1005, 1.0
    %v1007 = vrcp.pop %v1006
    %v1008 = vmul.f32 1.0, %v1007
    %1009 = vxpose.xlu0.b32.start [1/16] %v1008, 128
    %1010 = vxpose.xlu0.b32.cont [2/16] 0.0, 128
    %1011 = vxpose.xlu0.b32.cont [3/16] 0.0, 128
    %1012 = vxpose.xlu0.b32.cont [4/16] 0.0, 128
    %1013 = vxpose.xlu0.b32.cont [5/16] 0.0, 128
    %1014 = vxpose.xlu0.b32.cont [6/16] 0.0, 128
    %1015 = vxpose.xlu0.b32.cont [7/16] 0.0, 128
    %1016 = vxpose.xlu0.b32.cont [8/16] 0.0, 128
    %1017 = vxpose.xlu0.b32.cont [9/16] 0.0, 128
    %1018 = vxpose.xlu0.b32.cont [10/16] 0.0, 128
    %1019 = vxpose.xlu0.b32.cont [11/16] 0.0, 128
    %1020 = vxpose.xlu0.b32.cont [12/16] 0.0, 128
    %1021 = vxpose.xlu0.b32.cont [13/16] 0.0, 128
    %1022 = vxpose.xlu0.b32.cont [14/16] 0.0, 128
    %1023 = vxpose.xlu0.b32.cont [15/16] 0.0, 128
    %1024 = vxpose.xlu0.b32.end [16/16] 0.0, 128
    %v1025 = vpop.trf.xlu0
    %v1026 = vpop.trf.xlu0
    %v1027 = vpop.trf.xlu0
    %v1028 = vpop.trf.xlu0
    %v1029 = vpop.trf.xlu0
    %v1030 = vpop.trf.xlu0
    %v1031 = vpop.trf.xlu0
    %v1032 = vpop.trf.xlu0
    %v1033 = vpop.trf.xlu0
    %v1034 = vpop.trf.xlu0
    %v1035 = vpop.trf.xlu0
    %v1036 = vpop.trf.xlu0
    %v1037 = vpop.trf.xlu0
    %v1038 = vpop.trf.xlu0
    %v1039 = vpop.trf.xlu0
    %v1040 = vpop.trf.xlu0
    %v1041 = vmul.f32 %v1025, %v160
    %v1042 = vmul.f32 %v1008, %v101
    %v1043 = vmul.f32 %v1025, %v101
    %v1044 = vmul.f32 %v104, %v1041
    %v1045 = vmul.f32 %v105, %v1041
    %v1046 = vmul.f32 %v106, %v1041
    %v1047 = vmul.f32 %v107, %v1041
    %v1048 = vmul.f32 %v108, %v1041
    %v1049 = vmul.f32 %v109, %v1041
    %v1050 = vmul.f32 %v110, %v1041
    %v1051 = vmul.f32 %v111, %v1041
    %v1052 = vmul.f32 %v1044, %v257
    %v1053 = vmul.f32 %v1045, %v261
    %v1054 = vmul.f32 %v1046, %v265
    %v1055 = vmul.f32 %v1047, %v269
    %v1056 = vmul.f32 %v1048, %v273
    %v1057 = vmul.f32 %v1049, %v277
    %v1058 = vmul.f32 %v1050, %v281
    %v1059 = vmul.f32 %v1051, %v285
    %v1060 = vsel %vm302, %v1052, 0.0
    %1061 = vadd.xlane.f32.xlu0 %v1060
    %v1062 = vpop.xlane.xlu0 %1061
    %v1063 = vsel %vm302, %v1053, 0.0
    %1064 = vadd.xlane.f32.xlu0 %v1063
    %v1065 = vpop.xlane.xlu0 %1064
    %v1066 = vsel %vm302, %v1054, 0.0
    %1067 = vadd.xlane.f32.xlu0 %v1066
    %v1068 = vpop.xlane.xlu0 %1067
    %v1069 = vsel %vm302, %v1055, 0.0
    %1070 = vadd.xlane.f32.xlu0 %v1069
    %v1071 = vpop.xlane.xlu0 %1070
    %v1072 = vsel %vm302, %v1056, 0.0
    %1073 = vadd.xlane.f32.xlu0 %v1072
    %v1074 = vpop.xlane.xlu0 %1073
    %v1075 = vsel %vm302, %v1057, 0.0
    %1076 = vadd.xlane.f32.xlu0 %v1075
    %v1077 = vpop.xlane.xlu0 %1076
    %v1078 = vsel %vm302, %v1058, 0.0
    %1079 = vadd.xlane.f32.xlu0 %v1078
    %v1080 = vpop.xlane.xlu0 %1079
    %v1081 = vsel %vm302, %v1059, 0.0
    %1082 = vadd.xlane.f32.xlu0 %v1081
    %v1083 = vpop.xlane.xlu0 %1082
    %v1085 = vcombine.high %v1042, %v1042
    %v1087 = vunpack.c.l.s4 1966171168
    %v1088 = vunpack.c.0.s8 %v1087
    %v1089 = vlaneseq
    %v1090 = vshrl.u32 %v1089, 7
    %v1091 = vsub.s32 %v1088, %v1090
    %v1092 = vrot.slane %v1042, %v1091
    %v1094 = vunpack.c.l.s4 1966171168
    %v1095 = vunpack.c.0.s8 %v1094
    %v1096 = vlaneseq
    %v1097 = vshrl.u32 %v1096, 7
    %v1098 = vsub.s32 %v1095, %v1097
    %v1099 = vrot.slane %v1085, %v1098
    %v1100 = vcombine.high %v1092, %v1092
    %v1101 = vcombine.high %v1099, %v1099
    %v1103 = vunpack.c.l.s4 1966171168
    %v1104 = vunpack.c.0.s8 %v1103
    %v1105 = vlaneseq
    %v1106 = vshrl.u32 %v1105, 7
    %v1107 = vsub.s32 %v1104, %v1106
    %v1108 = vrot.slane %v1092, %v1107
    %v1110 = vunpack.c.l.s4 1966171168
    %v1111 = vunpack.c.0.s8 %v1110
    %v1112 = vlaneseq
    %v1113 = vshrl.u32 %v1112, 7
    %v1114 = vsub.s32 %v1111, %v1113
    %v1115 = vrot.slane %v1099, %v1114
    %v1117 = vunpack.c.l.s4 1966171168
    %v1118 = vunpack.c.0.s8 %v1117
    %v1119 = vlaneseq
    %v1120 = vshrl.u32 %v1119, 7
    %v1121 = vsub.s32 %v1118, %v1120
    %v1122 = vrot.slane %v1100, %v1121
    %v1124 = vunpack.c.l.s4 1966171168
    %v1125 = vunpack.c.0.s8 %v1124
    %v1126 = vlaneseq
    %v1127 = vshrl.u32 %v1126, 7
    %v1128 = vsub.s32 %v1125, %v1127
    %v1129 = vrot.slane %v1101, %v1128
    %v1130 = vcombine.high %v1108, %v1108
    %v1131 = vcombine.high %v1115, %v1115
    %v1132 = vcombine.high %v1122, %v1122
    %v1133 = vcombine.high %v1129, %v1129
    %v1134 = vlaneseq
    %v1135 = vshrl.u32 %v1134, 7
    %v1136 = vsub.s32 0, %v1135
    %v1137 = vrot.slane %v1108, %v1136
    %v1138 = vlaneseq
    %v1139 = vshrl.u32 %v1138, 7
    %v1140 = vsub.s32 0, %v1139
    %v1141 = vrot.slane %v1122, %v1140
    %v1142 = vlaneseq
    %v1143 = vshrl.u32 %v1142, 7
    %v1144 = vsub.s32 0, %v1143
    %v1145 = vrot.slane %v1130, %v1144
    %v1146 = vlaneseq
    %v1147 = vshrl.u32 %v1146, 7
    %v1148 = vsub.s32 0, %v1147
    %v1149 = vrot.slane %v1132, %v1148
    %v1150 = vlaneseq
    %v1151 = vshrl.u32 %v1150, 7
    %v1152 = vsub.s32 0, %v1151
    %v1153 = vrot.slane %v1115, %v1152
    %v1154 = vlaneseq
    %v1155 = vshrl.u32 %v1154, 7
    %v1156 = vsub.s32 0, %v1155
    %v1157 = vrot.slane %v1129, %v1156
    %v1158 = vlaneseq
    %v1159 = vshrl.u32 %v1158, 7
    %v1160 = vsub.s32 0, %v1159
    %v1161 = vrot.slane %v1131, %v1160
    %v1162 = vlaneseq
    %v1163 = vshrl.u32 %v1162, 7
    %v1164 = vsub.s32 0, %v1163
    %v1165 = vrot.slane %v1133, %v1164
    %v1174 = vmul.f32 %v112, %v1137
    %v1175 = vmul.f32 %v113, %v1141
    %v1176 = vmul.f32 %v114, %v1145
    %v1177 = vmul.f32 %v115, %v1149
    %v1178 = vmul.f32 %v116, %v1153
    %v1179 = vmul.f32 %v117, %v1157
    %v1180 = vmul.f32 %v118, %v1161
    %v1181 = vmul.f32 %v119, %v1165
    %v1183 = vcombine.high %v1043, %v1043
    %v1185 = vunpack.c.l.s4 1966171168
    %v1186 = vunpack.c.0.s8 %v1185
    %v1187 = vlaneseq
    %v1188 = vshrl.u32 %v1187, 7
    %v1189 = vsub.s32 %v1186, %v1188
    %v1190 = vrot.slane %v1043, %v1189
    %v1192 = vunpack.c.l.s4 1966171168
    %v1193 = vunpack.c.0.s8 %v1192
    %v1194 = vlaneseq
    %v1195 = vshrl.u32 %v1194, 7
    %v1196 = vsub.s32 %v1193, %v1195
    %v1197 = vrot.slane %v1183, %v1196
    %v1198 = vcombine.high %v1190, %v1190
    %v1199 = vcombine.high %v1197, %v1197
    %v1201 = vunpack.c.l.s4 1966171168
    %v1202 = vunpack.c.0.s8 %v1201
    %v1203 = vlaneseq
    %v1204 = vshrl.u32 %v1203, 7
    %v1205 = vsub.s32 %v1202, %v1204
    %v1206 = vrot.slane %v1190, %v1205
    %v1208 = vunpack.c.l.s4 1966171168
    %v1209 = vunpack.c.0.s8 %v1208
    %v1210 = vlaneseq
    %v1211 = vshrl.u32 %v1210, 7
    %v1212 = vsub.s32 %v1209, %v1211
    %v1213 = vrot.slane %v1197, %v1212
    %v1215 = vunpack.c.l.s4 1966171168
    %v1216 = vunpack.c.0.s8 %v1215
    %v1217 = vlaneseq
    %v1218 = vshrl.u32 %v1217, 7
    %v1219 = vsub.s32 %v1216, %v1218
    %v1220 = vrot.slane %v1198, %v1219
    %v1222 = vunpack.c.l.s4 1966171168
    %v1223 = vunpack.c.0.s8 %v1222
    %v1224 = vlaneseq
    %v1225 = vshrl.u32 %v1224, 7
    %v1226 = vsub.s32 %v1223, %v1225
    %v1227 = vrot.slane %v1199, %v1226
    %v1228 = vcombine.high %v1206, %v1206
    %v1229 = vcombine.high %v1213, %v1213
    %v1230 = vcombine.high %v1220, %v1220
    %v1231 = vcombine.high %v1227, %v1227
    %v1232 = vlaneseq
    %v1233 = vshrl.u32 %v1232, 7
    %v1234 = vsub.s32 0, %v1233
    %v1235 = vrot.slane %v1206, %v1234
    %v1236 = vlaneseq
    %v1237 = vshrl.u32 %v1236, 7
    %v1238 = vsub.s32 0, %v1237
    %v1239 = vrot.slane %v1220, %v1238
    %v1240 = vlaneseq
    %v1241 = vshrl.u32 %v1240, 7
    %v1242 = vsub.s32 0, %v1241
    %v1243 = vrot.slane %v1228, %v1242
    %v1244 = vlaneseq
    %v1245 = vshrl.u32 %v1244, 7
    %v1246 = vsub.s32 0, %v1245
    %v1247 = vrot.slane %v1230, %v1246
    %v1248 = vlaneseq
    %v1249 = vshrl.u32 %v1248, 7
    %v1250 = vsub.s32 0, %v1249
    %v1251 = vrot.slane %v1213, %v1250
    %v1252 = vlaneseq
    %v1253 = vshrl.u32 %v1252, 7
    %v1254 = vsub.s32 0, %v1253
    %v1255 = vrot.slane %v1227, %v1254
    %v1256 = vlaneseq
    %v1257 = vshrl.u32 %v1256, 7
    %v1258 = vsub.s32 0, %v1257
    %v1259 = vrot.slane %v1229, %v1258
    %v1260 = vlaneseq
    %v1261 = vshrl.u32 %v1260, 7
    %v1262 = vsub.s32 0, %v1261
    %v1263 = vrot.slane %v1231, %v1262
    %v1272 = vmul.f32 %v120, %v1235
    %v1273 = vmul.f32 %v121, %v1239
    %v1274 = vmul.f32 %v122, %v1243
    %v1275 = vmul.f32 %v123, %v1247
    %v1276 = vmul.f32 %v124, %v1251
    %v1277 = vmul.f32 %v125, %v1255
    %v1278 = vmul.f32 %v126, %v1259
    %v1279 = vmul.f32 %v127, %v1263
    %v1280 = vadd.f32 %v1174, %v1272
    %v1281 = vadd.f32 %v1175, %v1273
    %v1282 = vadd.f32 %v1176, %v1274
    %v1283 = vadd.f32 %v1177, %v1275
    %v1284 = vadd.f32 %v1178, %v1276
    %v1285 = vadd.f32 %v1179, %v1277
    %v1286 = vadd.f32 %v1180, %v1278
    %v1287 = vadd.f32 %v1181, %v1279
    %v1288 = vmul.f32 %v1280, %v160
    %v1289 = vmul.f32 %v1281, %v160
    %v1290 = vmul.f32 %v1282, %v160
    %v1291 = vmul.f32 %v1283, %v160
    %v1292 = vmul.f32 %v1284, %v160
    %v1293 = vmul.f32 %v1285, %v160
    %v1294 = vmul.f32 %v1286, %v160
    %v1295 = vmul.f32 %v1287, %v160
    %v1296 = vsel %vm302, %v1288, 0.0
    %1297 = vadd.xlane.f32.xlu0 %v1296
    %v1298 = vpop.xlane.xlu0 %1297
    %v1299 = vsel %vm302, %v1289, 0.0
    %1300 = vadd.xlane.f32.xlu0 %v1299
    %v1301 = vpop.xlane.xlu0 %1300
    %v1302 = vsel %vm302, %v1290, 0.0
    %1303 = vadd.xlane.f32.xlu0 %v1302
    %v1304 = vpop.xlane.xlu0 %1303
    %v1305 = vsel %vm302, %v1291, 0.0
    %1306 = vadd.xlane.f32.xlu0 %v1305
    %v1307 = vpop.xlane.xlu0 %1306
    %v1308 = vsel %vm302, %v1292, 0.0
    %1309 = vadd.xlane.f32.xlu0 %v1308
    %v1310 = vpop.xlane.xlu0 %1309
    %v1311 = vsel %vm302, %v1293, 0.0
    %1312 = vadd.xlane.f32.xlu0 %v1311
    %v1313 = vpop.xlane.xlu0 %1312
    %v1314 = vsel %vm302, %v1294, 0.0
    %1315 = vadd.xlane.f32.xlu0 %v1314
    %v1316 = vpop.xlane.xlu0 %1315
    %v1317 = vsel %vm302, %v1295, 0.0
    %1318 = vadd.xlane.f32.xlu0 %v1317
    %v1319 = vpop.xlane.xlu0 %1318
    %v1320 = vadd.f32 %v1062, %v1298
    %v1321 = vadd.f32 %v1065, %v1301
    %v1322 = vadd.f32 %v1068, %v1304
    %v1323 = vadd.f32 %v1071, %v1307
    %v1324 = vadd.f32 %v1074, %v1310
    %v1325 = vadd.f32 %v1077, %v1313
    %v1326 = vadd.f32 %v1080, %v1316
    %v1327 = vadd.f32 %v1083, %v1319
    %v1336 = vlaneseq
    %v1337 = vshrl.u32 %v1336, 7
    %v1338 = vsub.s32 %v98, %v1337
    %v1339 = vrot.slane %v1320, %v1338
    %v1340 = vlaneseq
    %v1341 = vshrl.u32 %v1340, 7
    %v1342 = vsub.s32 %v98, %v1341
    %v1343 = vrot.slane %v1321, %v1342
    %v1344 = vlaneseq
    %v1345 = vshrl.u32 %v1344, 7
    %v1346 = vsub.s32 %v98, %v1345
    %v1347 = vrot.slane %v1322, %v1346
    %v1348 = vlaneseq
    %v1349 = vshrl.u32 %v1348, 7
    %v1350 = vsub.s32 %v98, %v1349
    %v1351 = vrot.slane %v1323, %v1350
    %v1352 = vlaneseq
    %v1353 = vshrl.u32 %v1352, 7
    %v1354 = vsub.s32 %v98, %v1353
    %v1355 = vrot.slane %v1324, %v1354
    %v1356 = vlaneseq
    %v1357 = vshrl.u32 %v1356, 7
    %v1358 = vsub.s32 %v98, %v1357
    %v1359 = vrot.slane %v1325, %v1358
    %v1360 = vlaneseq
    %v1361 = vshrl.u32 %v1360, 7
    %v1362 = vsub.s32 %v98, %v1361
    %v1363 = vrot.slane %v1326, %v1362
    %v1364 = vlaneseq
    %v1365 = vshrl.u32 %v1364, 7
    %v1366 = vsub.s32 %v98, %v1365
    %v1367 = vrot.slane %v1327, %v1366
    %v1368 = vsel %vm611, %v1343, %v1339
    %v1369 = vsel %vm613, %v1347, %v1368
    %v1370 = vsel %vm615, %v1351, %v1369
    %v1371 = vsel %vm617, %v1355, %v1370
    %v1372 = vsel %vm619, %v1359, %v1371
    %v1373 = vsel %vm621, %v1363, %v1372
    %v1374 = vsel %vm623, %v1367, %v1373
    %v1376 = vmul.f32 %v103, %v1374
    %v1377 = vadd.f32 %v102, %v1376
    %v1378 = vmax.f32 %v1377, 0.0
    %v1379 = vand.u32 2147483647, %v1377
    %v1380 = vsub.f32 0.0, %v1379
    %v1381 = vmul.f32 %v1380, 1.442695
    %v1382 = vpow.pop %v1381
    %v1383 = vadd.f32 %v1382, 1.0
    %v1384 = vlog2.pop %v1383
    %v1385 = vmul.f32 %v1384, 0.6931472
    %v1386 = vadd.f32 %v1378, %v1385
    %v1387 = vsub.f32 0.0, %v1386
    %v1388 = vsub.f32 %v1377, %v1386
    %1389 = vst.msk [vmem:[#allocation11] sm:$0xff] %vm302, %v1387
    %1390 = vst.msk [vmem:[#allocation12] sm:$0xff] %vm302, %v1388
    %v1391 = vmul.f32 %v1387, 1.442695
    %v1392 = vpow.pop %v1391
    %1393 = vst.msk [vmem:[#allocation14] sm:$0xff] %vm302, %v1392
    %v1394 = vmul.f32 %v1388, 1.442695
    %v1395 = vpow.pop %v1394
    %1396 = vst.msk [vmem:[#allocation15] sm:$0xff] %vm302, %v1395
    %s1397 = scalar_lea.vmem [#allocation2], 8
    %v1398 = vld [vmem:[%s1397] sm:$0xff]
    %s1399 = scalar_lea.vmem [#allocation10], 8
    %v1400 = vld [vmem:[%s1399] sm:$0xff]
    %s1401 = scalar_lea.vmem [#allocation5], 64
    %v1402 = vld [vmem:[%s1401] sm:$0xff]
    %v1403 = vld [vmem:[%s1401 + $0x8] sm:$0xff]
    %v1404 = vld [vmem:[%s1401 + $0x10] sm:$0xff]
    %v1405 = vld [vmem:[%s1401 + $0x18] sm:$0xff]
    %v1406 = vld [vmem:[%s1401 + $0x20] sm:$0xff]
    %v1407 = vld [vmem:[%s1401 + $0x28] sm:$0xff]
    %v1408 = vld [vmem:[%s1401 + $0x30] sm:$0xff]
    %v1409 = vld [vmem:[%s1401 + $0x38] sm:$0xff]
    %s1410 = scalar_lea.vmem [#allocation7], 64
    %v1411 = vld [vmem:[%s1410] sm:$0xff]
    %v1412 = vld [vmem:[%s1410 + $0x8] sm:$0xff]
    %v1413 = vld [vmem:[%s1410 + $0x10] sm:$0xff]
    %v1414 = vld [vmem:[%s1410 + $0x18] sm:$0xff]
    %v1415 = vld [vmem:[%s1410 + $0x20] sm:$0xff]
    %v1416 = vld [vmem:[%s1410 + $0x28] sm:$0xff]
    %v1417 = vld [vmem:[%s1410 + $0x30] sm:$0xff]
    %v1418 = vld [vmem:[%s1410 + $0x38] sm:$0xff]
    %s1419 = scalar_lea.vmem [#allocation8], 64
    %v1420 = vld [vmem:[%s1419] sm:$0xff]
    %v1421 = vld [vmem:[%s1419 + $0x8] sm:$0xff]
    %v1422 = vld [vmem:[%s1419 + $0x10] sm:$0xff]
    %v1423 = vld [vmem:[%s1419 + $0x18] sm:$0xff]
    %v1424 = vld [vmem:[%s1419 + $0x20] sm:$0xff]
    %v1425 = vld [vmem:[%s1419 + $0x28] sm:$0xff]
    %v1426 = vld [vmem:[%s1419 + $0x30] sm:$0xff]
    %v1427 = vld [vmem:[%s1419 + $0x38] sm:$0xff]
    %1428 = vxpose.xlu0.b32.start [1/16] %v1400, 128
    %1429 = vxpose.xlu0.b32.cont [2/16] 0.0, 128
    %1430 = vxpose.xlu0.b32.cont [3/16] 0.0, 128
    %1431 = vxpose.xlu0.b32.cont [4/16] 0.0, 128
    %1432 = vxpose.xlu0.b32.cont [5/16] 0.0, 128
    %1433 = vxpose.xlu0.b32.cont [6/16] 0.0, 128
    %1434 = vxpose.xlu0.b32.cont [7/16] 0.0, 128
    %1435 = vxpose.xlu0.b32.cont [8/16] 0.0, 128
    %1436 = vxpose.xlu0.b32.cont [9/16] 0.0, 128
    %1437 = vxpose.xlu0.b32.cont [10/16] 0.0, 128
    %1438 = vxpose.xlu0.b32.cont [11/16] 0.0, 128
    %1439 = vxpose.xlu0.b32.cont [12/16] 0.0, 128
    %1440 = vxpose.xlu0.b32.cont [13/16] 0.0, 128
    %1441 = vxpose.xlu0.b32.cont [14/16] 0.0, 128
    %1442 = vxpose.xlu0.b32.cont [15/16] 0.0, 128
    %1443 = vxpose.xlu0.b32.end [16/16] 0.0, 128
    %v1444 = vpop.trf.xlu0
    %v1445 = vpop.trf.xlu0
    %v1446 = vpop.trf.xlu0
    %v1447 = vpop.trf.xlu0
    %v1448 = vpop.trf.xlu0
    %v1449 = vpop.trf.xlu0
    %v1450 = vpop.trf.xlu0
    %v1451 = vpop.trf.xlu0
    %v1452 = vpop.trf.xlu0
    %v1453 = vpop.trf.xlu0
    %v1454 = vpop.trf.xlu0
    %v1455 = vpop.trf.xlu0
    %v1456 = vpop.trf.xlu0
    %v1457 = vpop.trf.xlu0
    %v1458 = vpop.trf.xlu0
    %v1459 = vpop.trf.xlu0
    %v1460 = vmul.f32 %v1444, %v101
    %v1461 = vmul.f32 %v177, %v1460
    %v1462 = vmul.f32 %v1402, %v1461
    %v1463 = vmul.f32 %v1403, %v1461
    %v1464 = vmul.f32 %v1404, %v1461
    %v1465 = vmul.f32 %v1405, %v1461
    %v1466 = vmul.f32 %v1406, %v1461
    %v1467 = vmul.f32 %v1407, %v1461
    %v1468 = vmul.f32 %v1408, %v1461
    %v1469 = vmul.f32 %v1409, %v1461
    %v1470 = vmul.f32 %v1462, %v257
    %v1471 = vmul.f32 %v1463, %v261
    %v1472 = vmul.f32 %v1464, %v265
    %v1473 = vmul.f32 %v1465, %v269
    %v1474 = vmul.f32 %v1466, %v273
    %v1475 = vmul.f32 %v1467, %v277
    %v1476 = vmul.f32 %v1468, %v281
    %v1477 = vmul.f32 %v1469, %v285
    %v1478 = vsel %vm302, %v1470, 0.0
    %1479 = vadd.xlane.f32.xlu0 %v1478
    %v1480 = vpop.xlane.xlu0 %1479
    %v1481 = vsel %vm302, %v1471, 0.0
    %1482 = vadd.xlane.f32.xlu0 %v1481
    %v1483 = vpop.xlane.xlu0 %1482
    %v1484 = vsel %vm302, %v1472, 0.0
    %1485 = vadd.xlane.f32.xlu0 %v1484
    %v1486 = vpop.xlane.xlu0 %1485
    %v1487 = vsel %vm302, %v1473, 0.0
    %1488 = vadd.xlane.f32.xlu0 %v1487
    %v1489 = vpop.xlane.xlu0 %1488
    %v1490 = vsel %vm302, %v1474, 0.0
    %1491 = vadd.xlane.f32.xlu0 %v1490
    %v1492 = vpop.xlane.xlu0 %1491
    %v1493 = vsel %vm302, %v1475, 0.0
    %1494 = vadd.xlane.f32.xlu0 %v1493
    %v1495 = vpop.xlane.xlu0 %1494
    %v1496 = vsel %vm302, %v1476, 0.0
    %1497 = vadd.xlane.f32.xlu0 %v1496
    %v1498 = vpop.xlane.xlu0 %1497
    %v1499 = vsel %vm302, %v1477, 0.0
    %1500 = vadd.xlane.f32.xlu0 %v1499
    %v1501 = vpop.xlane.xlu0 %1500
    %v1502 = vmul.f32 %v1411, %v380
    %v1503 = vmul.f32 %v1412, %v384
    %v1504 = vmul.f32 %v1413, %v388
    %v1505 = vmul.f32 %v1414, %v392
    %v1506 = vmul.f32 %v1415, %v396
    %v1507 = vmul.f32 %v1416, %v400
    %v1508 = vmul.f32 %v1417, %v404
    %v1509 = vmul.f32 %v1418, %v408
    %v1510 = vmul.f32 %v1420, %v478
    %v1511 = vmul.f32 %v1421, %v482
    %v1512 = vmul.f32 %v1422, %v486
    %v1513 = vmul.f32 %v1423, %v490
    %v1514 = vmul.f32 %v1424, %v494
    %v1515 = vmul.f32 %v1425, %v498
    %v1516 = vmul.f32 %v1426, %v502
    %v1517 = vmul.f32 %v1427, %v506
    %v1518 = vadd.f32 %v1502, %v1510
    %v1519 = vadd.f32 %v1503, %v1511
    %v1520 = vadd.f32 %v1504, %v1512
    %v1521 = vadd.f32 %v1505, %v1513
    %v1522 = vadd.f32 %v1506, %v1514
    %v1523 = vadd.f32 %v1507, %v1515
    %v1524 = vadd.f32 %v1508, %v1516
    %v1525 = vadd.f32 %v1509, %v1517
    %v1526 = vmul.f32 %v1518, %v1460
    %v1527 = vmul.f32 %v1519, %v1460
    %v1528 = vmul.f32 %v1520, %v1460
    %v1529 = vmul.f32 %v1521, %v1460
    %v1530 = vmul.f32 %v1522, %v1460
    %v1531 = vmul.f32 %v1523, %v1460
    %v1532 = vmul.f32 %v1524, %v1460
    %v1533 = vmul.f32 %v1525, %v1460
    %v1534 = vsel %vm302, %v1526, 0.0
    %1535 = vadd.xlane.f32.xlu0 %v1534
    %v1536 = vpop.xlane.xlu0 %1535
    %v1537 = vsel %vm302, %v1527, 0.0
    %1538 = vadd.xlane.f32.xlu0 %v1537
    %v1539 = vpop.xlane.xlu0 %1538
    %v1540 = vsel %vm302, %v1528, 0.0
    %1541 = vadd.xlane.f32.xlu0 %v1540
    %v1542 = vpop.xlane.xlu0 %1541
    %v1543 = vsel %vm302, %v1529, 0.0
    %1544 = vadd.xlane.f32.xlu0 %v1543
    %v1545 = vpop.xlane.xlu0 %1544
    %v1546 = vsel %vm302, %v1530, 0.0
    %1547 = vadd.xlane.f32.xlu0 %v1546
    %v1548 = vpop.xlane.xlu0 %1547
    %v1549 = vsel %vm302, %v1531, 0.0
    %1550 = vadd.xlane.f32.xlu0 %v1549
    %v1551 = vpop.xlane.xlu0 %1550
    %v1552 = vsel %vm302, %v1532, 0.0
    %1553 = vadd.xlane.f32.xlu0 %v1552
    %v1554 = vpop.xlane.xlu0 %1553
    %v1555 = vsel %vm302, %v1533, 0.0
    %1556 = vadd.xlane.f32.xlu0 %v1555
    %v1557 = vpop.xlane.xlu0 %1556
    %v1558 = vadd.f32 %v1480, %v1536
    %v1559 = vadd.f32 %v1483, %v1539
    %v1560 = vadd.f32 %v1486, %v1542
    %v1561 = vadd.f32 %v1489, %v1545
    %v1562 = vadd.f32 %v1492, %v1548
    %v1563 = vadd.f32 %v1495, %v1551
    %v1564 = vadd.f32 %v1498, %v1554
    %v1565 = vadd.f32 %v1501, %v1557
    %v1574 = vlaneseq
    %v1575 = vshrl.u32 %v1574, 7
    %v1576 = vsub.s32 %v98, %v1575
    %v1577 = vrot.slane %v1558, %v1576
    %v1578 = vlaneseq
    %v1579 = vshrl.u32 %v1578, 7
    %v1580 = vsub.s32 %v98, %v1579
    %v1581 = vrot.slane %v1559, %v1580
    %v1582 = vlaneseq
    %v1583 = vshrl.u32 %v1582, 7
    %v1584 = vsub.s32 %v98, %v1583
    %v1585 = vrot.slane %v1560, %v1584
    %v1586 = vlaneseq
    %v1587 = vshrl.u32 %v1586, 7
    %v1588 = vsub.s32 %v98, %v1587
    %v1589 = vrot.slane %v1561, %v1588
    %v1590 = vlaneseq
    %v1591 = vshrl.u32 %v1590, 7
    %v1592 = vsub.s32 %v98, %v1591
    %v1593 = vrot.slane %v1562, %v1592
    %v1594 = vlaneseq
    %v1595 = vshrl.u32 %v1594, 7
    %v1596 = vsub.s32 %v98, %v1595
    %v1597 = vrot.slane %v1563, %v1596
    %v1598 = vlaneseq
    %v1599 = vshrl.u32 %v1598, 7
    %v1600 = vsub.s32 %v98, %v1599
    %v1601 = vrot.slane %v1564, %v1600
    %v1602 = vlaneseq
    %v1603 = vshrl.u32 %v1602, 7
    %v1604 = vsub.s32 %v98, %v1603
    %v1605 = vrot.slane %v1565, %v1604
    %v1606 = vsel %vm611, %v1581, %v1577
    %v1607 = vsel %vm613, %v1585, %v1606
    %v1608 = vsel %vm615, %v1589, %v1607
    %v1609 = vsel %vm617, %v1593, %v1608
    %v1610 = vsel %vm619, %v1597, %v1609
    %v1611 = vsel %vm621, %v1601, %v1610
    %v1612 = vsel %vm623, %v1605, %v1611
    %v1614 = vmul.f32 %v1400, %v1612
    %v1615 = vadd.f32 %v1398, %v1614
    %v1616 = vsub.f32 0.0, %v1615
    %v1617 = vmul.f32 %v1616, 1.442695
    %v1618 = vpow.pop %v1617
    %v1619 = vadd.f32 %v1618, 1.0
    %v1620 = vrcp.pop %v1619
    %v1621 = vmul.f32 1.0, %v1620
    %1622 = vxpose.xlu0.b32.start [1/16] %v1621, 128
    %1623 = vxpose.xlu0.b32.cont [2/16] 0.0, 128
    %1624 = vxpose.xlu0.b32.cont [3/16] 0.0, 128
    %1625 = vxpose.xlu0.b32.cont [4/16] 0.0, 128
    %1626 = vxpose.xlu0.b32.cont [5/16] 0.0, 128
    %1627 = vxpose.xlu0.b32.cont [6/16] 0.0, 128
    %1628 = vxpose.xlu0.b32.cont [7/16] 0.0, 128
    %1629 = vxpose.xlu0.b32.cont [8/16] 0.0, 128
    %1630 = vxpose.xlu0.b32.cont [9/16] 0.0, 128
    %1631 = vxpose.xlu0.b32.cont [10/16] 0.0, 128
    %1632 = vxpose.xlu0.b32.cont [11/16] 0.0, 128
    %1633 = vxpose.xlu0.b32.cont [12/16] 0.0, 128
    %1634 = vxpose.xlu0.b32.cont [13/16] 0.0, 128
    %1635 = vxpose.xlu0.b32.cont [14/16] 0.0, 128
    %1636 = vxpose.xlu0.b32.cont [15/16] 0.0, 128
    %1637 = vxpose.xlu0.b32.end [16/16] 0.0, 128
    %v1638 = vpop.trf.xlu0
    %v1639 = vpop.trf.xlu0
    %v1640 = vpop.trf.xlu0
    %v1641 = vpop.trf.xlu0
    %v1642 = vpop.trf.xlu0
    %v1643 = vpop.trf.xlu0
    %v1644 = vpop.trf.xlu0
    %v1645 = vpop.trf.xlu0
    %v1646 = vpop.trf.xlu0
    %v1647 = vpop.trf.xlu0
    %v1648 = vpop.trf.xlu0
    %v1649 = vpop.trf.xlu0
    %v1650 = vpop.trf.xlu0
    %v1651 = vpop.trf.xlu0
    %v1652 = vpop.trf.xlu0
    %v1653 = vpop.trf.xlu0
    %v1654 = vmul.f32 %v1638, %v1460
    %v1655 = vmul.f32 %v1621, %v101
    %v1656 = vmul.f32 %v1638, %v101
    %v1657 = vmul.f32 %v1402, %v1654
    %v1658 = vmul.f32 %v1403, %v1654
    %v1659 = vmul.f32 %v1404, %v1654
    %v1660 = vmul.f32 %v1405, %v1654
    %v1661 = vmul.f32 %v1406, %v1654
    %v1662 = vmul.f32 %v1407, %v1654
    %v1663 = vmul.f32 %v1408, %v1654
    %v1664 = vmul.f32 %v1409, %v1654
    %v1665 = vmul.f32 %v1657, %v257
    %v1666 = vmul.f32 %v1658, %v261
    %v1667 = vmul.f32 %v1659, %v265
    %v1668 = vmul.f32 %v1660, %v269
    %v1669 = vmul.f32 %v1661, %v273
    %v1670 = vmul.f32 %v1662, %v277
    %v1671 = vmul.f32 %v1663, %v281
    %v1672 = vmul.f32 %v1664, %v285
    %v1673 = vsel %vm302, %v1665, 0.0
    %1674 = vadd.xlane.f32.xlu0 %v1673
    %v1675 = vpop.xlane.xlu0 %1674
    %v1676 = vsel %vm302, %v1666, 0.0
    %1677 = vadd.xlane.f32.xlu0 %v1676
    %v1678 = vpop.xlane.xlu0 %1677
    %v1679 = vsel %vm302, %v1667, 0.0
    %1680 = vadd.xlane.f32.xlu0 %v1679
    %v1681 = vpop.xlane.xlu0 %1680
    %v1682 = vsel %vm302, %v1668, 0.0
    %1683 = vadd.xlane.f32.xlu0 %v1682
    %v1684 = vpop.xlane.xlu0 %1683
    %v1685 = vsel %vm302, %v1669, 0.0
    %1686 = vadd.xlane.f32.xlu0 %v1685
    %v1687 = vpop.xlane.xlu0 %1686
    %v1688 = vsel %vm302, %v1670, 0.0
    %1689 = vadd.xlane.f32.xlu0 %v1688
    %v1690 = vpop.xlane.xlu0 %1689
    %v1691 = vsel %vm302, %v1671, 0.0
    %1692 = vadd.xlane.f32.xlu0 %v1691
    %v1693 = vpop.xlane.xlu0 %1692
    %v1694 = vsel %vm302, %v1672, 0.0
    %1695 = vadd.xlane.f32.xlu0 %v1694
    %v1696 = vpop.xlane.xlu0 %1695
    %v1698 = vcombine.high %v1655, %v1655
    %v1700 = vunpack.c.l.s4 1966171168
    %v1701 = vunpack.c.0.s8 %v1700
    %v1702 = vlaneseq
    %v1703 = vshrl.u32 %v1702, 7
    %v1704 = vsub.s32 %v1701, %v1703
    %v1705 = vrot.slane %v1655, %v1704
    %v1707 = vunpack.c.l.s4 1966171168
    %v1708 = vunpack.c.0.s8 %v1707
    %v1709 = vlaneseq
    %v1710 = vshrl.u32 %v1709, 7
    %v1711 = vsub.s32 %v1708, %v1710
    %v1712 = vrot.slane %v1698, %v1711
    %v1713 = vcombine.high %v1705, %v1705
    %v1714 = vcombine.high %v1712, %v1712
    %v1716 = vunpack.c.l.s4 1966171168
    %v1717 = vunpack.c.0.s8 %v1716
    %v1718 = vlaneseq
    %v1719 = vshrl.u32 %v1718, 7
    %v1720 = vsub.s32 %v1717, %v1719
    %v1721 = vrot.slane %v1705, %v1720
    %v1723 = vunpack.c.l.s4 1966171168
    %v1724 = vunpack.c.0.s8 %v1723
    %v1725 = vlaneseq
    %v1726 = vshrl.u32 %v1725, 7
    %v1727 = vsub.s32 %v1724, %v1726
    %v1728 = vrot.slane %v1712, %v1727
    %v1730 = vunpack.c.l.s4 1966171168
    %v1731 = vunpack.c.0.s8 %v1730
    %v1732 = vlaneseq
    %v1733 = vshrl.u32 %v1732, 7
    %v1734 = vsub.s32 %v1731, %v1733
    %v1735 = vrot.slane %v1713, %v1734
    %v1737 = vunpack.c.l.s4 1966171168
    %v1738 = vunpack.c.0.s8 %v1737
    %v1739 = vlaneseq
    %v1740 = vshrl.u32 %v1739, 7
    %v1741 = vsub.s32 %v1738, %v1740
    %v1742 = vrot.slane %v1714, %v1741
    %v1743 = vcombine.high %v1721, %v1721
    %v1744 = vcombine.high %v1728, %v1728
    %v1745 = vcombine.high %v1735, %v1735
    %v1746 = vcombine.high %v1742, %v1742
    %v1747 = vlaneseq
    %v1748 = vshrl.u32 %v1747, 7
    %v1749 = vsub.s32 0, %v1748
    %v1750 = vrot.slane %v1721, %v1749
    %v1751 = vlaneseq
    %v1752 = vshrl.u32 %v1751, 7
    %v1753 = vsub.s32 0, %v1752
    %v1754 = vrot.slane %v1735, %v1753
    %v1755 = vlaneseq
    %v1756 = vshrl.u32 %v1755, 7
    %v1757 = vsub.s32 0, %v1756
    %v1758 = vrot.slane %v1743, %v1757
    %v1759 = vlaneseq
    %v1760 = vshrl.u32 %v1759, 7
    %v1761 = vsub.s32 0, %v1760
    %v1762 = vrot.slane %v1745, %v1761
    %v1763 = vlaneseq
    %v1764 = vshrl.u32 %v1763, 7
    %v1765 = vsub.s32 0, %v1764
    %v1766 = vrot.slane %v1728, %v1765
    %v1767 = vlaneseq
    %v1768 = vshrl.u32 %v1767, 7
    %v1769 = vsub.s32 0, %v1768
    %v1770 = vrot.slane %v1742, %v1769
    %v1771 = vlaneseq
    %v1772 = vshrl.u32 %v1771, 7
    %v1773 = vsub.s32 0, %v1772
    %v1774 = vrot.slane %v1744, %v1773
    %v1775 = vlaneseq
    %v1776 = vshrl.u32 %v1775, 7
    %v1777 = vsub.s32 0, %v1776
    %v1778 = vrot.slane %v1746, %v1777
    %v1787 = vmul.f32 %v1411, %v1750
    %v1788 = vmul.f32 %v1412, %v1754
    %v1789 = vmul.f32 %v1413, %v1758
    %v1790 = vmul.f32 %v1414, %v1762
    %v1791 = vmul.f32 %v1415, %v1766
    %v1792 = vmul.f32 %v1416, %v1770
    %v1793 = vmul.f32 %v1417, %v1774
    %v1794 = vmul.f32 %v1418, %v1778
    %v1796 = vcombine.high %v1656, %v1656
    %v1798 = vunpack.c.l.s4 1966171168
    %v1799 = vunpack.c.0.s8 %v1798
    %v1800 = vlaneseq
    %v1801 = vshrl.u32 %v1800, 7
    %v1802 = vsub.s32 %v1799, %v1801
    %v1803 = vrot.slane %v1656, %v1802
    %v1805 = vunpack.c.l.s4 1966171168
    %v1806 = vunpack.c.0.s8 %v1805
    %v1807 = vlaneseq
    %v1808 = vshrl.u32 %v1807, 7
    %v1809 = vsub.s32 %v1806, %v1808
    %v1810 = vrot.slane %v1796, %v1809
    %v1811 = vcombine.high %v1803, %v1803
    %v1812 = vcombine.high %v1810, %v1810
    %v1814 = vunpack.c.l.s4 1966171168
    %v1815 = vunpack.c.0.s8 %v1814
    %v1816 = vlaneseq
    %v1817 = vshrl.u32 %v1816, 7
    %v1818 = vsub.s32 %v1815, %v1817
    %v1819 = vrot.slane %v1803, %v1818
    %v1821 = vunpack.c.l.s4 1966171168
    %v1822 = vunpack.c.0.s8 %v1821
    %v1823 = vlaneseq
    %v1824 = vshrl.u32 %v1823, 7
    %v1825 = vsub.s32 %v1822, %v1824
    %v1826 = vrot.slane %v1810, %v1825
    %v1828 = vunpack.c.l.s4 1966171168
    %v1829 = vunpack.c.0.s8 %v1828
    %v1830 = vlaneseq
    %v1831 = vshrl.u32 %v1830, 7
    %v1832 = vsub.s32 %v1829, %v1831
    %v1833 = vrot.slane %v1811, %v1832
    %v1835 = vunpack.c.l.s4 1966171168
    %v1836 = vunpack.c.0.s8 %v1835
    %v1837 = vlaneseq
    %v1838 = vshrl.u32 %v1837, 7
    %v1839 = vsub.s32 %v1836, %v1838
    %v1840 = vrot.slane %v1812, %v1839
    %v1841 = vcombine.high %v1819, %v1819
    %v1842 = vcombine.high %v1826, %v1826
    %v1843 = vcombine.high %v1833, %v1833
    %v1844 = vcombine.high %v1840, %v1840
    %v1845 = vlaneseq
    %v1846 = vshrl.u32 %v1845, 7
    %v1847 = vsub.s32 0, %v1846
    %v1848 = vrot.slane %v1819, %v1847
    %v1849 = vlaneseq
    %v1850 = vshrl.u32 %v1849, 7
    %v1851 = vsub.s32 0, %v1850
    %v1852 = vrot.slane %v1833, %v1851
    %v1853 = vlaneseq
    %v1854 = vshrl.u32 %v1853, 7
    %v1855 = vsub.s32 0, %v1854
    %v1856 = vrot.slane %v1841, %v1855
    %v1857 = vlaneseq
    %v1858 = vshrl.u32 %v1857, 7
    %v1859 = vsub.s32 0, %v1858
    %v1860 = vrot.slane %v1843, %v1859
    %v1861 = vlaneseq
    %v1862 = vshrl.u32 %v1861, 7
    %v1863 = vsub.s32 0, %v1862
    %v1864 = vrot.slane %v1826, %v1863
    %v1865 = vlaneseq
    %v1866 = vshrl.u32 %v1865, 7
    %v1867 = vsub.s32 0, %v1866
    %v1868 = vrot.slane %v1840, %v1867
    %v1869 = vlaneseq
    %v1870 = vshrl.u32 %v1869, 7
    %v1871 = vsub.s32 0, %v1870
    %v1872 = vrot.slane %v1842, %v1871
    %v1873 = vlaneseq
    %v1874 = vshrl.u32 %v1873, 7
    %v1875 = vsub.s32 0, %v1874
    %v1876 = vrot.slane %v1844, %v1875
    %v1885 = vmul.f32 %v1420, %v1848
    %v1886 = vmul.f32 %v1421, %v1852
    %v1887 = vmul.f32 %v1422, %v1856
    %v1888 = vmul.f32 %v1423, %v1860
    %v1889 = vmul.f32 %v1424, %v1864
    %v1890 = vmul.f32 %v1425, %v1868
    %v1891 = vmul.f32 %v1426, %v1872
    %v1892 = vmul.f32 %v1427, %v1876
    %v1893 = vadd.f32 %v1787, %v1885
    %v1894 = vadd.f32 %v1788, %v1886
    %v1895 = vadd.f32 %v1789, %v1887
    %v1896 = vadd.f32 %v1790, %v1888
    %v1897 = vadd.f32 %v1791, %v1889
    %v1898 = vadd.f32 %v1792, %v1890
    %v1899 = vadd.f32 %v1793, %v1891
    %v1900 = vadd.f32 %v1794, %v1892
    %v1901 = vmul.f32 %v1893, %v1460
    %v1902 = vmul.f32 %v1894, %v1460
    %v1903 = vmul.f32 %v1895, %v1460
    %v1904 = vmul.f32 %v1896, %v1460
    %v1905 = vmul.f32 %v1897, %v1460
    %v1906 = vmul.f32 %v1898, %v1460
    %v1907 = vmul.f32 %v1899, %v1460
    %v1908 = vmul.f32 %v1900, %v1460
    %v1909 = vsel %vm302, %v1901, 0.0
    %1910 = vadd.xlane.f32.xlu0 %v1909
    %v1911 = vpop.xlane.xlu0 %1910
    %v1912 = vsel %vm302, %v1902, 0.0
    %1913 = vadd.xlane.f32.xlu0 %v1912
    %v1914 = vpop.xlane.xlu0 %1913
    %v1915 = vsel %vm302, %v1903, 0.0
    %1916 = vadd.xlane.f32.xlu0 %v1915
    %v1917 = vpop.xlane.xlu0 %1916
    %v1918 = vsel %vm302, %v1904, 0.0
    %1919 = vadd.xlane.f32.xlu0 %v1918
    %v1920 = vpop.xlane.xlu0 %1919
    %v1921 = vsel %vm302, %v1905, 0.0
    %1922 = vadd.xlane.f32.xlu0 %v1921
    %v1923 = vpop.xlane.xlu0 %1922
    %v1924 = vsel %vm302, %v1906, 0.0
    %1925 = vadd.xlane.f32.xlu0 %v1924
    %v1926 = vpop.xlane.xlu0 %1925
    %v1927 = vsel %vm302, %v1907, 0.0
    %1928 = vadd.xlane.f32.xlu0 %v1927
    %v1929 = vpop.xlane.xlu0 %1928
    %v1930 = vsel %vm302, %v1908, 0.0
    %1931 = vadd.xlane.f32.xlu0 %v1930
    %v1932 = vpop.xlane.xlu0 %1931
    %v1933 = vadd.f32 %v1675, %v1911
    %v1934 = vadd.f32 %v1678, %v1914
    %v1935 = vadd.f32 %v1681, %v1917
    %v1936 = vadd.f32 %v1684, %v1920
    %v1937 = vadd.f32 %v1687, %v1923
    %v1938 = vadd.f32 %v1690, %v1926
    %v1939 = vadd.f32 %v1693, %v1929
    %v1940 = vadd.f32 %v1696, %v1932
    %v1949 = vlaneseq
    %v1950 = vshrl.u32 %v1949, 7
    %v1951 = vsub.s32 %v98, %v1950
    %v1952 = vrot.slane %v1933, %v1951
    %v1953 = vlaneseq
    %v1954 = vshrl.u32 %v1953, 7
    %v1955 = vsub.s32 %v98, %v1954
    %v1956 = vrot.slane %v1934, %v1955
    %v1957 = vlaneseq
    %v1958 = vshrl.u32 %v1957, 7
    %v1959 = vsub.s32 %v98, %v1958
    %v1960 = vrot.slane %v1935, %v1959
    %v1961 = vlaneseq
    %v1962 = vshrl.u32 %v1961, 7
    %v1963 = vsub.s32 %v98, %v1962
    %v1964 = vrot.slane %v1936, %v1963
    %v1965 = vlaneseq
    %v1966 = vshrl.u32 %v1965, 7
    %v1967 = vsub.s32 %v98, %v1966
    %v1968 = vrot.slane %v1937, %v1967
    %v1969 = vlaneseq
    %v1970 = vshrl.u32 %v1969, 7
    %v1971 = vsub.s32 %v98, %v1970
    %v1972 = vrot.slane %v1938, %v1971
    %v1973 = vlaneseq
    %v1974 = vshrl.u32 %v1973, 7
    %v1975 = vsub.s32 %v98, %v1974
    %v1976 = vrot.slane %v1939, %v1975
    %v1977 = vlaneseq
    %v1978 = vshrl.u32 %v1977, 7
    %v1979 = vsub.s32 %v98, %v1978
    %v1980 = vrot.slane %v1940, %v1979
    %v1981 = vsel %vm611, %v1956, %v1952
    %v1982 = vsel %vm613, %v1960, %v1981
    %v1983 = vsel %vm615, %v1964, %v1982
    %v1984 = vsel %vm617, %v1968, %v1983
    %v1985 = vsel %vm619, %v1972, %v1984
    %v1986 = vsel %vm621, %v1976, %v1985
    %v1987 = vsel %vm623, %v1980, %v1986
    %v1989 = vmul.f32 %v1400, %v1987
    %v1990 = vadd.f32 %v1398, %v1989
    %v1991 = vsub.f32 0.0, %v1990
    %v1992 = vmul.f32 %v1991, 1.442695
    %v1993 = vpow.pop %v1992
    %v1994 = vadd.f32 %v1993, 1.0
    %v1995 = vrcp.pop %v1994
    %v1996 = vmul.f32 1.0, %v1995
    %1997 = vxpose.xlu0.b32.start [1/16] %v1996, 128
    %1998 = vxpose.xlu0.b32.cont [2/16] 0.0, 128
    %1999 = vxpose.xlu0.b32.cont [3/16] 0.0, 128
    %2000 = vxpose.xlu0.b32.cont [4/16] 0.0, 128
    %2001 = vxpose.xlu0.b32.cont [5/16] 0.0, 128
    %2002 = vxpose.xlu0.b32.cont [6/16] 0.0, 128
    %2003 = vxpose.xlu0.b32.cont [7/16] 0.0, 128
    %2004 = vxpose.xlu0.b32.cont [8/16] 0.0, 128
    %2005 = vxpose.xlu0.b32.cont [9/16] 0.0, 128
    %2006 = vxpose.xlu0.b32.cont [10/16] 0.0, 128
    %2007 = vxpose.xlu0.b32.cont [11/16] 0.0, 128
    %2008 = vxpose.xlu0.b32.cont [12/16] 0.0, 128
    %2009 = vxpose.xlu0.b32.cont [13/16] 0.0, 128
    %2010 = vxpose.xlu0.b32.cont [14/16] 0.0, 128
    %2011 = vxpose.xlu0.b32.cont [15/16] 0.0, 128
    %2012 = vxpose.xlu0.b32.end [16/16] 0.0, 128
    %v2013 = vpop.trf.xlu0
    %v2014 = vpop.trf.xlu0
    %v2015 = vpop.trf.xlu0
    %v2016 = vpop.trf.xlu0
    %v2017 = vpop.trf.xlu0
    %v2018 = vpop.trf.xlu0
    %v2019 = vpop.trf.xlu0
    %v2020 = vpop.trf.xlu0
    %v2021 = vpop.trf.xlu0
    %v2022 = vpop.trf.xlu0
    %v2023 = vpop.trf.xlu0
    %v2024 = vpop.trf.xlu0
    %v2025 = vpop.trf.xlu0
    %v2026 = vpop.trf.xlu0
    %v2027 = vpop.trf.xlu0
    %v2028 = vpop.trf.xlu0
    %v2029 = vmul.f32 %v2013, %v1460
    %v2030 = vmul.f32 %v1996, %v101
    %v2031 = vmul.f32 %v2013, %v101
    %v2032 = vmul.f32 %v1402, %v2029
    %v2033 = vmul.f32 %v1403, %v2029
    %v2034 = vmul.f32 %v1404, %v2029
    %v2035 = vmul.f32 %v1405, %v2029
    %v2036 = vmul.f32 %v1406, %v2029
    %v2037 = vmul.f32 %v1407, %v2029
    %v2038 = vmul.f32 %v1408, %v2029
    %v2039 = vmul.f32 %v1409, %v2029
    %v2040 = vmul.f32 %v2032, %v257
    %v2041 = vmul.f32 %v2033, %v261
    %v2042 = vmul.f32 %v2034, %v265
    %v2043 = vmul.f32 %v2035, %v269
    %v2044 = vmul.f32 %v2036, %v273
    %v2045 = vmul.f32 %v2037, %v277
    %v2046 = vmul.f32 %v2038, %v281
    %v2047 = vmul.f32 %v2039, %v285
    %v2048 = vsel %vm302, %v2040, 0.0
    %2049 = vadd.xlane.f32.xlu0 %v2048
    %v2050 = vpop.xlane.xlu0 %2049
    %v2051 = vsel %vm302, %v2041, 0.0
    %2052 = vadd.xlane.f32.xlu0 %v2051
    %v2053 = vpop.xlane.xlu0 %2052
    %v2054 = vsel %vm302, %v2042, 0.0
    %2055 = vadd.xlane.f32.xlu0 %v2054
    %v2056 = vpop.xlane.xlu0 %2055
    %v2057 = vsel %vm302, %v2043, 0.0
    %2058 = vadd.xlane.f32.xlu0 %v2057
    %v2059 = vpop.xlane.xlu0 %2058
    %v2060 = vsel %vm302, %v2044, 0.0
    %2061 = vadd.xlane.f32.xlu0 %v2060
    %v2062 = vpop.xlane.xlu0 %2061
    %v2063 = vsel %vm302, %v2045, 0.0
    %2064 = vadd.xlane.f32.xlu0 %v2063
    %v2065 = vpop.xlane.xlu0 %2064
    %v2066 = vsel %vm302, %v2046, 0.0
    %2067 = vadd.xlane.f32.xlu0 %v2066
    %v2068 = vpop.xlane.xlu0 %2067
    %v2069 = vsel %vm302, %v2047, 0.0
    %2070 = vadd.xlane.f32.xlu0 %v2069
    %v2071 = vpop.xlane.xlu0 %2070
    %v2073 = vcombine.high %v2030, %v2030
    %v2075 = vunpack.c.l.s4 1966171168
    %v2076 = vunpack.c.0.s8 %v2075
    %v2077 = vlaneseq
    %v2078 = vshrl.u32 %v2077, 7
    %v2079 = vsub.s32 %v2076, %v2078
    %v2080 = vrot.slane %v2030, %v2079
    %v2082 = vunpack.c.l.s4 1966171168
    %v2083 = vunpack.c.0.s8 %v2082
    %v2084 = vlaneseq
    %v2085 = vshrl.u32 %v2084, 7
    %v2086 = vsub.s32 %v2083, %v2085
    %v2087 = vrot.slane %v2073, %v2086
    %v2088 = vcombine.high %v2080, %v2080
    %v2089 = vcombine.high %v2087, %v2087
    %v2091 = vunpack.c.l.s4 1966171168
    %v2092 = vunpack.c.0.s8 %v2091
    %v2093 = vlaneseq
    %v2094 = vshrl.u32 %v2093, 7
    %v2095 = vsub.s32 %v2092, %v2094
    %v2096 = vrot.slane %v2080, %v2095
    %v2098 = vunpack.c.l.s4 1966171168
    %v2099 = vunpack.c.0.s8 %v2098
    %v2100 = vlaneseq
    %v2101 = vshrl.u32 %v2100, 7
    %v2102 = vsub.s32 %v2099, %v2101
    %v2103 = vrot.slane %v2087, %v2102
    %v2105 = vunpack.c.l.s4 1966171168
    %v2106 = vunpack.c.0.s8 %v2105
    %v2107 = vlaneseq
    %v2108 = vshrl.u32 %v2107, 7
    %v2109 = vsub.s32 %v2106, %v2108
    %v2110 = vrot.slane %v2088, %v2109
    %v2112 = vunpack.c.l.s4 1966171168
    %v2113 = vunpack.c.0.s8 %v2112
    %v2114 = vlaneseq
    %v2115 = vshrl.u32 %v2114, 7
    %v2116 = vsub.s32 %v2113, %v2115
    %v2117 = vrot.slane %v2089, %v2116
    %v2118 = vcombine.high %v2096, %v2096
    %v2119 = vcombine.high %v2103, %v2103
    %v2120 = vcombine.high %v2110, %v2110
    %v2121 = vcombine.high %v2117, %v2117
    %v2122 = vlaneseq
    %v2123 = vshrl.u32 %v2122, 7
    %v2124 = vsub.s32 0, %v2123
    %v2125 = vrot.slane %v2096, %v2124
    %v2126 = vlaneseq
    %v2127 = vshrl.u32 %v2126, 7
    %v2128 = vsub.s32 0, %v2127
    %v2129 = vrot.slane %v2110, %v2128
    %v2130 = vlaneseq
    %v2131 = vshrl.u32 %v2130, 7
    %v2132 = vsub.s32 0, %v2131
    %v2133 = vrot.slane %v2118, %v2132
    %v2134 = vlaneseq
    %v2135 = vshrl.u32 %v2134, 7
    %v2136 = vsub.s32 0, %v2135
    %v2137 = vrot.slane %v2120, %v2136
    %v2138 = vlaneseq
    %v2139 = vshrl.u32 %v2138, 7
    %v2140 = vsub.s32 0, %v2139
    %v2141 = vrot.slane %v2103, %v2140
    %v2142 = vlaneseq
    %v2143 = vshrl.u32 %v2142, 7
    %v2144 = vsub.s32 0, %v2143
    %v2145 = vrot.slane %v2117, %v2144
    %v2146 = vlaneseq
    %v2147 = vshrl.u32 %v2146, 7
    %v2148 = vsub.s32 0, %v2147
    %v2149 = vrot.slane %v2119, %v2148
    %v2150 = vlaneseq
    %v2151 = vshrl.u32 %v2150, 7
    %v2152 = vsub.s32 0, %v2151
    %v2153 = vrot.slane %v2121, %v2152
    %v2162 = vmul.f32 %v1411, %v2125
    %v2163 = vmul.f32 %v1412, %v2129
    %v2164 = vmul.f32 %v1413, %v2133
    %v2165 = vmul.f32 %v1414, %v2137
    %v2166 = vmul.f32 %v1415, %v2141
    %v2167 = vmul.f32 %v1416, %v2145
    %v2168 = vmul.f32 %v1417, %v2149
    %v2169 = vmul.f32 %v1418, %v2153
    %v2171 = vcombine.high %v2031, %v2031
    %v2173 = vunpack.c.l.s4 1966171168
    %v2174 = vunpack.c.0.s8 %v2173
    %v2175 = vlaneseq
    %v2176 = vshrl.u32 %v2175, 7
    %v2177 = vsub.s32 %v2174, %v2176
    %v2178 = vrot.slane %v2031, %v2177
    %v2180 = vunpack.c.l.s4 1966171168
    %v2181 = vunpack.c.0.s8 %v2180
    %v2182 = vlaneseq
    %v2183 = vshrl.u32 %v2182, 7
    %v2184 = vsub.s32 %v2181, %v2183
    %v2185 = vrot.slane %v2171, %v2184
    %v2186 = vcombine.high %v2178, %v2178
    %v2187 = vcombine.high %v2185, %v2185
    %v2189 = vunpack.c.l.s4 1966171168
    %v2190 = vunpack.c.0.s8 %v2189
    %v2191 = vlaneseq
    %v2192 = vshrl.u32 %v2191, 7
    %v2193 = vsub.s32 %v2190, %v2192
    %v2194 = vrot.slane %v2178, %v2193
    %v2196 = vunpack.c.l.s4 1966171168
    %v2197 = vunpack.c.0.s8 %v2196
    %v2198 = vlaneseq
    %v2199 = vshrl.u32 %v2198, 7
    %v2200 = vsub.s32 %v2197, %v2199
    %v2201 = vrot.slane %v2185, %v2200
    %v2203 = vunpack.c.l.s4 1966171168
    %v2204 = vunpack.c.0.s8 %v2203
    %v2205 = vlaneseq
    %v2206 = vshrl.u32 %v2205, 7
    %v2207 = vsub.s32 %v2204, %v2206
    %v2208 = vrot.slane %v2186, %v2207
    %v2210 = vunpack.c.l.s4 1966171168
    %v2211 = vunpack.c.0.s8 %v2210
    %v2212 = vlaneseq
    %v2213 = vshrl.u32 %v2212, 7
    %v2214 = vsub.s32 %v2211, %v2213
    %v2215 = vrot.slane %v2187, %v2214
    %v2216 = vcombine.high %v2194, %v2194
    %v2217 = vcombine.high %v2201, %v2201
    %v2218 = vcombine.high %v2208, %v2208
    %v2219 = vcombine.high %v2215, %v2215
    %v2220 = vlaneseq
    %v2221 = vshrl.u32 %v2220, 7
    %v2222 = vsub.s32 0, %v2221
    %v2223 = vrot.slane %v2194, %v2222
    %v2224 = vlaneseq
    %v2225 = vshrl.u32 %v2224, 7
    %v2226 = vsub.s32 0, %v2225
    %v2227 = vrot.slane %v2208, %v2226
    %v2228 = vlaneseq
    %v2229 = vshrl.u32 %v2228, 7
    %v2230 = vsub.s32 0, %v2229
    %v2231 = vrot.slane %v2216, %v2230
    %v2232 = vlaneseq
    %v2233 = vshrl.u32 %v2232, 7
    %v2234 = vsub.s32 0, %v2233
    %v2235 = vrot.slane %v2218, %v2234
    %v2236 = vlaneseq
    %v2237 = vshrl.u32 %v2236, 7
    %v2238 = vsub.s32 0, %v2237
    %v2239 = vrot.slane %v2201, %v2238
    %v2240 = vlaneseq
    %v2241 = vshrl.u32 %v2240, 7
    %v2242 = vsub.s32 0, %v2241
    %v2243 = vrot.slane %v2215, %v2242
    %v2244 = vlaneseq
    %v2245 = vshrl.u32 %v2244, 7
    %v2246 = vsub.s32 0, %v2245
    %v2247 = vrot.slane %v2217, %v2246
    %v2248 = vlaneseq
    %v2249 = vshrl.u32 %v2248, 7
    %v2250 = vsub.s32 0, %v2249
    %v2251 = vrot.slane %v2219, %v2250
    %v2260 = vmul.f32 %v1420, %v2223
    %v2261 = vmul.f32 %v1421, %v2227
    %v2262 = vmul.f32 %v1422, %v2231
    %v2263 = vmul.f32 %v1423, %v2235
    %v2264 = vmul.f32 %v1424, %v2239
    %v2265 = vmul.f32 %v1425, %v2243
    %v2266 = vmul.f32 %v1426, %v2247
    %v2267 = vmul.f32 %v1427, %v2251
    %v2268 = vadd.f32 %v2162, %v2260
    %v2269 = vadd.f32 %v2163, %v2261
    %v2270 = vadd.f32 %v2164, %v2262
    %v2271 = vadd.f32 %v2165, %v2263
    %v2272 = vadd.f32 %v2166, %v2264
    %v2273 = vadd.f32 %v2167, %v2265
    %v2274 = vadd.f32 %v2168, %v2266
    %v2275 = vadd.f32 %v2169, %v2267
    %v2276 = vmul.f32 %v2268, %v1460
    %v2277 = vmul.f32 %v2269, %v1460
    %v2278 = vmul.f32 %v2270, %v1460
    %v2279 = vmul.f32 %v2271, %v1460
    %v2280 = vmul.f32 %v2272, %v1460
    %v2281 = vmul.f32 %v2273, %v1460
    %v2282 = vmul.f32 %v2274, %v1460
    %v2283 = vmul.f32 %v2275, %v1460
    %v2284 = vsel %vm302, %v2276, 0.0
    %2285 = vadd.xlane.f32.xlu0 %v2284
    %v2286 = vpop.xlane.xlu0 %2285
    %v2287 = vsel %vm302, %v2277, 0.0
    %2288 = vadd.xlane.f32.xlu0 %v2287
    %v2289 = vpop.xlane.xlu0 %2288
    %v2290 = vsel %vm302, %v2278, 0.0
    %2291 = vadd.xlane.f32.xlu0 %v2290
    %v2292 = vpop.xlane.xlu0 %2291
    %v2293 = vsel %vm302, %v2279, 0.0
    %2294 = vadd.xlane.f32.xlu0 %v2293
    %v2295 = vpop.xlane.xlu0 %2294
    %v2296 = vsel %vm302, %v2280, 0.0
    %2297 = vadd.xlane.f32.xlu0 %v2296
    %v2298 = vpop.xlane.xlu0 %2297
    %v2299 = vsel %vm302, %v2281, 0.0
    %2300 = vadd.xlane.f32.xlu0 %v2299
    %v2301 = vpop.xlane.xlu0 %2300
    %v2302 = vsel %vm302, %v2282, 0.0
    %2303 = vadd.xlane.f32.xlu0 %v2302
    %v2304 = vpop.xlane.xlu0 %2303
    %v2305 = vsel %vm302, %v2283, 0.0
    %2306 = vadd.xlane.f32.xlu0 %v2305
    %v2307 = vpop.xlane.xlu0 %2306
    %v2308 = vadd.f32 %v2050, %v2286
    %v2309 = vadd.f32 %v2053, %v2289
    %v2310 = vadd.f32 %v2056, %v2292
    %v2311 = vadd.f32 %v2059, %v2295
    %v2312 = vadd.f32 %v2062, %v2298
    %v2313 = vadd.f32 %v2065, %v2301
    %v2314 = vadd.f32 %v2068, %v2304
    %v2315 = vadd.f32 %v2071, %v2307
    %v2324 = vlaneseq
    %v2325 = vshrl.u32 %v2324, 7
    %v2326 = vsub.s32 %v98, %v2325
    %v2327 = vrot.slane %v2308, %v2326
    %v2328 = vlaneseq
    %v2329 = vshrl.u32 %v2328, 7
    %v2330 = vsub.s32 %v98, %v2329
    %v2331 = vrot.slane %v2309, %v2330
    %v2332 = vlaneseq
    %v2333 = vshrl.u32 %v2332, 7
    %v2334 = vsub.s32 %v98, %v2333
    %v2335 = vrot.slane %v2310, %v2334
    %v2336 = vlaneseq
    %v2337 = vshrl.u32 %v2336, 7
    %v2338 = vsub.s32 %v98, %v2337
    %v2339 = vrot.slane %v2311, %v2338
    %v2340 = vlaneseq
    %v2341 = vshrl.u32 %v2340, 7
    %v2342 = vsub.s32 %v98, %v2341
    %v2343 = vrot.slane %v2312, %v2342
    %v2344 = vlaneseq
    %v2345 = vshrl.u32 %v2344, 7
    %v2346 = vsub.s32 %v98, %v2345
    %v2347 = vrot.slane %v2313, %v2346
    %v2348 = vlaneseq
    %v2349 = vshrl.u32 %v2348, 7
    %v2350 = vsub.s32 %v98, %v2349
    %v2351 = vrot.slane %v2314, %v2350
    %v2352 = vlaneseq
    %v2353 = vshrl.u32 %v2352, 7
    %v2354 = vsub.s32 %v98, %v2353
    %v2355 = vrot.slane %v2315, %v2354
    %v2356 = vsel %vm611, %v2331, %v2327
    %v2357 = vsel %vm613, %v2335, %v2356
    %v2358 = vsel %vm615, %v2339, %v2357
    %v2359 = vsel %vm617, %v2343, %v2358
    %v2360 = vsel %vm619, %v2347, %v2359
    %v2361 = vsel %vm621, %v2351, %v2360
    %v2362 = vsel %vm623, %v2355, %v2361
    %v2364 = vmul.f32 %v1400, %v2362
    %v2365 = vadd.f32 %v1398, %v2364
    %v2366 = vmax.f32 %v2365, 0.0
    %v2367 = vand.u32 2147483647, %v2365
    %v2368 = vsub.f32 0.0, %v2367
    %v2369 = vmul.f32 %v2368, 1.442695
    %v2370 = vpow.pop %v2369
    %v2371 = vadd.f32 %v2370, 1.0
    %v2372 = vlog2.pop %v2371
    %v2373 = vmul.f32 %v2372, 0.6931472
    %v2374 = vadd.f32 %v2366, %v2373
    %v2375 = vsub.f32 0.0, %v2374
    %v2376 = vsub.f32 %v2365, %v2374
    %s2377 = scalar_lea.vmem [#allocation11], 8
    %2378 = vst.msk [vmem:[%s2377] sm:$0xff] %vm302, %v2375
    %s2379 = scalar_lea.vmem [#allocation12], 8
    %2380 = vst.msk [vmem:[%s2379] sm:$0xff] %vm302, %v2376
    %v2381 = vmul.f32 %v2375, 1.442695
    %v2382 = vpow.pop %v2381
    %s2383 = scalar_lea.vmem [#allocation14], 8
    %2384 = vst.msk [vmem:[%s2383] sm:$0xff] %vm302, %v2382
    %v2385 = vmul.f32 %v2376, 1.442695
    %v2386 = vpow.pop %v2385
    %s2387 = scalar_lea.vmem [#allocation15], 8
    %2388 = vst.msk [vmem:[%s2387] sm:$0xff] %vm302, %v2386
    // Predicated region
    $region42: #{tpu_custom_call.1} parent=1 // pred_check
      _
    $region43: #{tpu_custom_call.1} parent=1 // pred_check_branch
      %2390 = sbr.rel (0) target = $region45
    $region44: #{tpu_custom_call.1} parent=1 // pred_region
      %s2392 = ssub.s32 256, 256
      %2393 = vsyncadd [#allocation4], %s2392
      %s2394 = sshll.u32 [#allocation11], 4
      %s2395 = int_to_ptr.vmem [resolvable:$true] %s2394
      %2400 = dma.vmem_to_hbm [thread:$0]  %s2395, 256, %s5, [#allocation4], 128, 128, 8
    $region45: #{tpu_custom_call.1} parent=1 // pred_fallthru
      _
    // Predicated region
    $region46: #{tpu_custom_call.1} parent=1 // pred_check
      _
    $region47: #{tpu_custom_call.1} parent=1 // pred_check_branch
      %2402 = sbr.rel (0) target = $region49
    $region48: #{tpu_custom_call.1} parent=1 // pred_region
      %s2404 = ssub.s32 256, 256
      %2405 = vsyncadd [#allocation13], %s2404
      %s2406 = sshll.u32 [#allocation12], 4
      %s2407 = int_to_ptr.vmem [resolvable:$true] %s2406
      %2412 = dma.vmem_to_hbm [thread:$0]  %s2407, 256, %s6, [#allocation13], 128, 128, 8
    $region49: #{tpu_custom_call.1} parent=1 // pred_fallthru
      _
    // Predicated region
    $region50: #{tpu_custom_call.1} parent=1 // pred_check
      _
    $region51: #{tpu_custom_call.1} parent=1 // pred_check_branch
      %2414 = sbr.rel (0) target = $region53
    $region52: #{tpu_custom_call.1} parent=1 // pred_region
      %s2416 = ssub.s32 256, 256
      %2417 = vsyncadd [#allocation13], %s2416
      %s2418 = sshll.u32 [#allocation14], 4
      %s2419 = int_to_ptr.vmem [resolvable:$true] %s2418
      %2424 = dma.vmem_to_hbm [thread:$0]  %s2419, 256, %s7, [#allocation13], 128, 128, 8
    $region53: #{tpu_custom_call.1} parent=1 // pred_fallthru
      _
    // Predicated region
    $region54: #{tpu_custom_call.1} parent=1 // pred_check
      _
    $region55: #{tpu_custom_call.1} parent=1 // pred_check_branch
      %2426 = sbr.rel (0) target = $region57
    $region56: #{tpu_custom_call.1} parent=1 // pred_region
      %s2428 = ssub.s32 256, 256
      %2429 = vsyncadd [#allocation16], %s2428
      %s2430 = sshll.u32 [#allocation15], 4
      %s2431 = int_to_ptr.vmem [resolvable:$true] %s2430
      %2436 = dma.vmem_to_hbm [thread:$0]  %s2431, 256, %s8, [#allocation16], 128, 128, 8
    $region57: #{tpu_custom_call.1} parent=1 // pred_fallthru
      _
    // Predicated region
    $region58: #{tpu_custom_call.1} parent=1 // pred_check
      _
    $region59: #{tpu_custom_call.1} parent=1 // pred_check_branch
      %2438 = sbr.rel (0) target = $region61
    $region60: #{tpu_custom_call.1} parent=1 // pred_region
      %2439 = dma.done [#allocation4], 256
    $region61: #{tpu_custom_call.1} parent=1 // pred_fallthru
      _
    // Predicated region
    $region62: #{tpu_custom_call.1} parent=1 // pred_check
      _
    $region63: #{tpu_custom_call.1} parent=1 // pred_check_branch
      %2441 = sbr.rel (0) target = $region65
    $region64: #{tpu_custom_call.1} parent=1 // pred_region
      %2442 = dma.done [#allocation13], 256
    $region65: #{tpu_custom_call.1} parent=1 // pred_fallthru
      _
    // Predicated region
    $region66: #{tpu_custom_call.1} parent=1 // pred_check
      _
    $region67: #{tpu_custom_call.1} parent=1 // pred_check_branch
      %2444 = sbr.rel (0) target = $region69
    $region68: #{tpu_custom_call.1} parent=1 // pred_region
      %2445 = dma.done [#allocation13], 256
    $region69: #{tpu_custom_call.1} parent=1 // pred_fallthru
      _
    // Predicated region
    $region70: #{tpu_custom_call.1} parent=1 // pred_check
      _
    $region71: #{tpu_custom_call.1} parent=1 // pred_check_branch
      %2447 = sbr.rel (0) target = $region73
    $region72: #{tpu_custom_call.1} parent=1 // pred_region
      %2448 = dma.done [#allocation16], 256
    $region73: #{tpu_custom_call.1} parent=1 // pred_fallthru
      _
    %2449 = vsyncpa [#allocation3], 1
    %2450 = vsyncpa [#allocation6], 1
    %2451 = vsyncpa [#allocation9], 1
    %2452 = vsyncpa [#allocation4], 1
    %2453 = vsyncpa [#allocation13], 1
    %2454 = vsyncpa [#allocation16], 1

</llo_original>
